<compile_context>
chip_gen: v7x
topology: tpu7x:2x2x1
jax: 0.10.0
libtpu: 0.0.40
codegen_flags: <defaults>
</compile_context>

<pallas_src>
import jax
import jax.numpy as jnp
import numpy as np
from jax.experimental import pallas as pl
from jax.experimental.pallas import tpu as pltpu

# ----- static module config (small, consistent with the PyTorch module) -----
DIM = 3          # point dimension
C_DIM = 16       # latent code dimension
HIDDEN = 32      # hidden size
N_BLOCKS = 5     # number of ResnetBlockFC blocks
GAUSSIAN_VAL = 1.0
VAR = GAUSSIAN_VAL ** 2   # sample_mode == 'gaussian'


def _decoder_kernel(p_ref, ppa_ref, fea_ref,
                    wpb_ref, wcb_ref, blkw_ref, blkb_ref,
                    wout_ref, bout_ref,
                    out_ref):
    p = p_ref[0]        # (tile_T, DIM)
    ppa = ppa_ref[0]    # (DIM+1, N)  rows = [-2*pp_x; -2*pp_y; -2*pp_z; ||pp||^2]
    fea = fea_ref[0]    # (N, C_DIM)
    tile_t = p.shape[0]

    ones = jnp.ones((tile_t, 1), jnp.float32)
    p_aug = jnp.concatenate([p, ones], axis=-1)                 # (tile_T, DIM+1)

    # ---------------- sample_point_feature (gaussian mode) ----------------
    # sq[t, n] = ||p_t - pp_n||^2 = p_aug @ [-2*pp; ||pp||^2] + ||p_t||^2
    # -> one lane-dense (tile_T, N) MXU matmul instead of a (T, N, 3) broadcast.
    p_sq = jnp.sum(p * p, axis=-1, keepdims=True)               # (tile_T, 1)
    sq = jnp.dot(p_aug, ppa, preferred_element_type=jnp.float32) + p_sq
    dist = jnp.sqrt(jnp.maximum(sq, 0.0))                       # clamp matmul round-off
    expo = -jnp.square(dist + 1e-5) * (1.0 / VAR)               # (tile_T, N)
    # Subtract the per-row max: mathematically identical after normalization,
    # prevents the row-sum from underflowing to 0 for distant queries.
    expo = expo - jnp.max(expo, axis=-1, keepdims=True)
    w = jnp.exp(expo)
    wsum = jnp.sum(w, axis=-1, keepdims=True)                   # (tile_T, 1)
    c = jnp.dot(w, fea, preferred_element_type=jnp.float32)     # (tile_T, C)
    # normalize after the matmul: tile_T*C multiplies instead of tile_T*N divides
    c = c * pl.reciprocal(wsum, approx=False)

    # ---------------- fc_p (bias folded via the ones column) ----------------
    net = jnp.dot(p_aug, wpb_ref[...], preferred_element_type=jnp.float32)  # (tile_T, H)

    # ------- fused conditioning: all 5 fc_c matmuls as one 160-lane matmul -------
    c_aug = jnp.concatenate([c, ones], axis=-1)                 # (tile_T, C+1)
    c_proj = jnp.dot(c_aug, wcb_ref[...],
                     preferred_element_type=jnp.float32)        # (tile_T, 5*H)

    # ---------------- blocks: net = blocks[i](net + fc_c[i](c)) ----------------
    for i in range(N_BLOCKS):
        net = net + c_proj[:, i * HIDDEN:(i + 1) * HIDDEN]
        # ResnetBlockFC (size_in == size_out -> identity shortcut)
        h = jnp.dot(jnp.maximum(net, 0.0), blkw_ref[i, 0],
                    preferred_element_type=jnp.float32) + blkb_ref[i, 0]
        dx = jnp.dot(jnp.maximum(h, 0.0), blkw_ref[i, 1],
                     preferred_element_type=jnp.float32) + blkb_ref[i, 1]
        net = net + dx

    # ---------------- fc_out(actvn(net)), produced lane-dense as (1, tile_T) ----------------
    out_row = jax.lax.dot_general(
        wout_ref[...], jnp.maximum(net, 0.0),
        dimension_numbers=(((1,), (1,)), ((), ())),
        preferred_element_type=jnp.float32)                     # (1, H) x (tile_T, H)^T -> (1, tile_T)
    out_ref[0] = (out_row + bout_ref[...]).astype(out_ref.dtype)


def local_point_decoder(p, pp, fea, params, tile_t=None):
    """Pallas forward. p:(B,T,dim), pp:(B,N,dim), fea:(B,N,C) -> (B,T)."""
    B, T, dim = p.shape
    N = pp.shape[1]
    wp, bp, wc, bc, w0, b0, w1, b1, wout, bout = params

    # ---- host-side packing (tiny XLA ops, done once per call) ----
    # context slab for the distance matmul: rows = [-2*pp ; ||pp||^2], shape (B, dim+1, N)
    ppa = jnp.concatenate([-2.0 * pp, jnp.sum(pp * pp, axis=-1, keepdims=True)],
                          axis=-1)
    ppa = jnp.swapaxes(ppa, 1, 2)
    wpb = jnp.concatenate([wp, bp], axis=0)                       # (dim+1, H)
    wc_flat = jnp.transpose(wc, (1, 0, 2)).reshape(C_DIM, N_BLOCKS * HIDDEN)
    bc_flat = bc.reshape(1, N_BLOCKS * HIDDEN)
    wcb = jnp.concatenate([wc_flat, bc_flat], axis=0)             # (C+1, 5*H)
    blkw = jnp.stack([w0, w1], axis=1)                            # (n_blocks, 2, H, H)
    blkb = jnp.stack([b0, b1], axis=1)                            # (n_blocks, 2, 1, H)
    wout_row = wout.T                                             # (1, H)

    # ---- T tiling: lane-dense blocks, grid over (batch, T tiles) ----
    # v5e/v6e (128 MiB VMEM): tile_t up to 512-1024 is fine for large T;
    # v7x (64 MiB VMEM): keep the (tile_t, N) intermediates smaller -> ~256.
    if tile_t is None:
        tile_t = T if T <= 256 else 256
    tile_t = min(tile_t, T)
    grid = (B, pl.cdiv(T, tile_t))

    out = pl.pallas_call(
        _decoder_kernel,
        out_shape=jax.ShapeDtypeStruct((B, 1, T), jnp.float32),
        grid=grid,
        in_specs=[
            pl.BlockSpec((1, tile_t, dim), lambda b, t: (b, t, 0)),
            pl.BlockSpec((1, dim + 1, N), lambda b, t: (b, 0, 0)),
            pl.BlockSpec((1, N, C_DIM), lambda b, t: (b, 0, 0)),
            pl.BlockSpec((dim + 1, HIDDEN), lambda b, t: (0, 0)),
            pl.BlockSpec((C_DIM + 1, N_BLOCKS * HIDDEN), lambda b, t: (0, 0)),
            pl.BlockSpec((N_BLOCKS, 2, HIDDEN, HIDDEN), lambda b, t: (0, 0, 0, 0)),
            pl.BlockSpec((N_BLOCKS, 2, 1, HIDDEN), lambda b, t: (0, 0, 0, 0)),
            pl.BlockSpec((1, HIDDEN), lambda b, t: (0, 0)),
            pl.BlockSpec((1, 1), lambda b, t: (0, 0)),
        ],
        out_specs=pl.BlockSpec((1, 1, tile_t), lambda b, t: (b, 0, t)),
        compiler_params=pltpu.CompilerParams(
            dimension_semantics=("parallel", "parallel")),
    )(p, ppa, fea, wpb, wcb, blkw, blkb, wout_row, bout)
    return out[:, 0, :]


def reference(p, pp, fea, params):
    """Pure-JAX reference matching the PyTorch forward pass."""
    wp, bp, wc, bc, w0, b0, w1, b1, wout, bout = params
    diff = p[:, :, None, :] - pp[:, None, :, :]            # (B, T, N, dim)
    dist = jnp.sqrt(jnp.sum(diff * diff, axis=-1))         # norm(dim=3)
    w = jnp.exp(-((dist + 1e-5) ** 2) / VAR)
    w = w / jnp.sum(w, axis=-1, keepdims=True)
    c = w @ fea                                            # (B, T, C)
    net = p @ wp + bp
    for i in range(N_BLOCKS):
        net = net + c @ wc[i] + bc[i]
        h = jnp.maximum(net, 0.0) @ w0[i] + b0[i]
        dx = jnp.maximum(h, 0.0) @ w1[i] + b1[i]
        net = net + dx
    out = jnp.maximum(net, 0.0) @ wout + bout
    return out[..., 0]


def init_params(key):
    ks = jax.random.split(key, 10)
    s = 0.1
    wp = s * jax.random.normal(ks[0], (DIM, HIDDEN), jnp.float32)
    bp = s * jax.random.normal(ks[1], (1, HIDDEN), jnp.float32)
    wc = s * jax.random.normal(ks[2], (N_BLOCKS, C_DIM, HIDDEN), jnp.float32)
    bc = s * jax.random.normal(ks[3], (N_BLOCKS, 1, HIDDEN), jnp.float32)
    w0 = s * jax.random.normal(ks[4], (N_BLOCKS, HIDDEN, HIDDEN), jnp.float32)
    b0 = s * jax.random.normal(ks[5], (N_BLOCKS, 1, HIDDEN), jnp.float32)
    w1 = s * jax.random.normal(ks[6], (N_BLOCKS, HIDDEN, HIDDEN), jnp.float32)
    b1 = s * jax.random.normal(ks[7], (N_BLOCKS, 1, HIDDEN), jnp.float32)
    wout = s * jax.random.normal(ks[8], (HIDDEN, 1), jnp.float32)
    bout = s * jax.random.normal(ks[9], (1, 1), jnp.float32)
    return (wp, bp, wc, bc, w0, b0, w1, b1, wout, bout)


if __name__ == "__main__":
    key = jax.random.PRNGKey(0)
    k_p, k_pp, k_fea, k_params = jax.random.split(key, 4)

    B, T, N = 2, 8, 16
    p = jax.random.normal(k_p, (B, T, DIM), jnp.float32)        # query points
    pp = jax.random.normal(k_pp, (B, N, DIM), jnp.float32)      # context points
    fea = jax.random.normal(k_fea, (B, N, C_DIM), jnp.float32)  # context features
    params = init_params(k_params)

    out = local_point_decoder(p, pp, fea, params)
    out = jax.block_until_ready(out)

    ref = reference(p, pp, fea, params)
    np.testing.assert_allclose(np.asarray(out), np.asarray(ref),
                               rtol=1e-4, atol=1e-4)
    assert out.shape == (B, T)
    print("KERNEL_OK")
</pallas_src>

<mosaic_0001>
module attributes {stable_mosaic.version = 11 : i64} {
  func.func @_decoder_kernel(%arg0: i32, %arg1: i32, %arg2: memref<1x8x3xf32, #tpu.memory_space<vmem>>, %arg3: memref<1x4x16xf32, #tpu.memory_space<vmem>>, %arg4: memref<1x16x16xf32, #tpu.memory_space<vmem>>, %arg5: memref<4x32xf32, #tpu.memory_space<vmem>>, %arg6: memref<17x160xf32, #tpu.memory_space<vmem>>, %arg7: memref<5x2x32x32xf32, #tpu.memory_space<vmem>>, %arg8: memref<5x2x1x32xf32, #tpu.memory_space<vmem>>, %arg9: memref<1x32xf32, #tpu.memory_space<vmem>>, %arg10: memref<1x1xf32, #tpu.memory_space<vmem>>, %arg11: memref<1x1x8xf32, #tpu.memory_space<vmem>>) attributes {dimension_semantics = [#tpu.dimension_semantics<parallel>, #tpu.dimension_semantics<parallel>], iteration_bounds = array<i64: 2, 1>, scalar_prefetch = 0 : i64, scratch_operands = 0 : i64, tpu.core_type = #tpu.core_type<tc>, window_params = [{transform_indices = @transform_0, window_bounds = array<i64: 1, 8, 3>}, {transform_indices = @transform_1, window_bounds = array<i64: 1, 4, 16>}, {transform_indices = @transform_2, window_bounds = array<i64: 1, 16, 16>}, {pipeline_mode = #tpu.pipeline_mode<synchronous>, transform_indices = @transform_3, window_bounds = array<i64: 4, 32>}, {pipeline_mode = #tpu.pipeline_mode<synchronous>, transform_indices = @transform_4, window_bounds = array<i64: 17, 160>}, {pipeline_mode = #tpu.pipeline_mode<synchronous>, transform_indices = @transform_5, window_bounds = array<i64: 5, 2, 32, 32>}, {pipeline_mode = #tpu.pipeline_mode<synchronous>, transform_indices = @transform_6, window_bounds = array<i64: 5, 2, 1, 32>}, {pipeline_mode = #tpu.pipeline_mode<synchronous>, transform_indices = @transform_7, window_bounds = array<i64: 1, 32>}, {pipeline_mode = #tpu.pipeline_mode<synchronous>, transform_indices = @transform_8, window_bounds = array<i64: 1, 1>}, {transform_indices = @transform_9, window_bounds = array<i64: 1, 1, 8>}]} {
    %c0 = arith.constant 0 : index
    %c0_0 = arith.constant 0 : index
    %c0_1 = arith.constant 0 : index
    %0 = vector.load %arg2[%c0, %c0_0, %c0_1] : memref<1x8x3xf32, #tpu.memory_space<vmem>>, vector<1x8x3xf32>
    %1 = vector.shape_cast %0 : vector<1x8x3xf32> to vector<8x3xf32>
    %c0_2 = arith.constant 0 : index
    %c0_3 = arith.constant 0 : index
    %c0_4 = arith.constant 0 : index
    %2 = vector.load %arg3[%c0_2, %c0_3, %c0_4] : memref<1x4x16xf32, #tpu.memory_space<vmem>>, vector<1x4x16xf32>
    %3 = vector.shape_cast %2 : vector<1x4x16xf32> to vector<4x16xf32>
    %c0_5 = arith.constant 0 : index
    %c0_6 = arith.constant 0 : index
    %c0_7 = arith.constant 0 : index
    %4 = vector.load %arg4[%c0_5, %c0_6, %c0_7] : memref<1x16x16xf32, #tpu.memory_space<vmem>>, vector<1x16x16xf32>
    %5 = vector.shape_cast %4 : vector<1x16x16xf32> to vector<16x16xf32>
    %cst = arith.constant 1.000000e+00 : f32
    %6 = vector.broadcast %cst : f32 to vector<8x1xf32>
    %7 = tpu.concatenate %1, %6 in 1 : vector<8x3xf32>, vector<8x1xf32> -> vector<8x4xf32>
    %8 = arith.mulf %1, %1 : vector<8x3xf32>
    %cst_8 = arith.constant dense<0.000000e+00> : vector<8xf32>
    %9 = vector.multi_reduction <add>, %8, %cst_8 [1] : vector<8x3xf32> to vector<8xf32>
    %10 = vector.shape_cast %9 : vector<8xf32> to vector<8x1xf32>
    %cst_9 = arith.constant dense<0.000000e+00> : vector<8x16xf32>
    %11 = tpu.matmul %7, %3, %cst_9 {dimension_numbers = #tpu.dot_dimension_numbers<[1], [0], [0], [1], [0, 0, 1, 1], [], []>} : vector<8x4xf32>, vector<4x16xf32>, vector<8x16xf32> -> vector<8x16xf32>
    %12 = vector.broadcast %10 : vector<8x1xf32> to vector<8x16xf32>
    %13 = arith.addf %11, %12 : vector<8x16xf32>
    %cst_10 = arith.constant 0.000000e+00 : f32
    %14 = vector.broadcast %cst_10 : f32 to vector<8x16xf32>
    %15 = arith.maximumf %13, %14 : vector<8x16xf32>
    %16 = math.sqrt %15 : vector<8x16xf32>
    %cst_11 = arith.constant 9.99999974E-6 : f32
    %17 = vector.broadcast %cst_11 : f32 to vector<8x16xf32>
    %18 = arith.addf %16, %17 : vector<8x16xf32>
    %19 = arith.mulf %18, %18 : vector<8x16xf32>
    %cst_12 = arith.constant 0.000000e+00 : f32
    %20 = vector.broadcast %cst_12 : f32 to vector<8x16xf32>
    %21 = arith.subf %20, %19 : vector<8x16xf32>
    %cst_13 = arith.constant 1.000000e+00 : f32
    %22 = vector.broadcast %cst_13 : f32 to vector<8x16xf32>
    %23 = arith.mulf %21, %22 : vector<8x16xf32>
    %cst_14 = arith.constant dense<0xFF800000> : vector<8xf32>
    %24 = vector.multi_reduction <maximumf>, %23, %cst_14 [1] : vector<8x16xf32> to vector<8xf32>
    %25 = vector.shape_cast %24 : vector<8xf32> to vector<8x1xf32>
    %26 = vector.broadcast %25 : vector<8x1xf32> to vector<8x16xf32>
    %27 = arith.subf %23, %26 : vector<8x16xf32>
    %28 = math.exp %27 : vector<8x16xf32>
    %cst_15 = arith.constant dense<0.000000e+00> : vector<8xf32>
    %29 = vector.multi_reduction <add>, %28, %cst_15 [1] : vector<8x16xf32> to vector<8xf32>
    %30 = vector.shape_cast %29 : vector<8xf32> to vector<8x1xf32>
    %cst_16 = arith.constant dense<0.000000e+00> : vector<8x16xf32>
    %31 = tpu.matmul %28, %5, %cst_16 {dimension_numbers = #tpu.dot_dimension_numbers<[1], [0], [0], [1], [0, 0, 1, 1], [], []>} : vector<8x16xf32>, vector<16x16xf32>, vector<8x16xf32> -> vector<8x16xf32>
    %32 = tpu.reciprocal %30 : vector<8x1xf32> -> vector<8x1xf32>
    %33 = vector.broadcast %32 : vector<8x1xf32> to vector<8x16xf32>
    %34 = arith.mulf %31, %33 : vector<8x16xf32>
    %c0_17 = arith.constant 0 : index
    %c0_18 = arith.constant 0 : index
    %35 = vector.load %arg5[%c0_17, %c0_18] : memref<4x32xf32, #tpu.memory_space<vmem>>, vector<4x32xf32>
    %cst_19 = arith.constant dense<0.000000e+00> : vector<8x32xf32>
    %36 = tpu.matmul %7, %35, %cst_19 {dimension_numbers = #tpu.dot_dimension_numbers<[1], [0], [0], [1], [0, 0, 1, 1], [], []>} : vector<8x4xf32>, vector<4x32xf32>, vector<8x32xf32> -> vector<8x32xf32>
    %37 = tpu.concatenate %34, %6 in 1 : vector<8x16xf32>, vector<8x1xf32> -> vector<8x17xf32>
    %c0_20 = arith.constant 0 : index
    %c0_21 = arith.constant 0 : index
    %38 = vector.load %arg6[%c0_20, %c0_21] : memref<17x160xf32, #tpu.memory_space<vmem>>, vector<17x160xf32>
    %cst_22 = arith.constant dense<0.000000e+00> : vector<8x160xf32>
    %39 = tpu.matmul %37, %38, %cst_22 {dimension_numbers = #tpu.dot_dimension_numbers<[1], [0], [0], [1], [0, 0, 1, 1], [], []>} : vector<8x17xf32>, vector<17x160xf32>, vector<8x160xf32> -> vector<8x160xf32>
    %40 = vector.extract_strided_slice %39 {offsets = [0, 0], sizes = [8, 32], strides = [1, 1]} : vector<8x160xf32> to vector<8x32xf32>
    %41 = arith.addf %36, %40 : vector<8x32xf32>
    %cst_23 = arith.constant 0.000000e+00 : f32
    %42 = vector.broadcast %cst_23 : f32 to vector<8x32xf32>
    %43 = arith.maximumf %41, %42 : vector<8x32xf32>
    %c0_24 = arith.constant 0 : index
    %c0_25 = arith.constant 0 : index
    %c0_26 = arith.constant 0 : index
    %c0_27 = arith.constant 0 : index
    %44 = vector.load %arg7[%c0_24, %c0_25, %c0_26, %c0_27] : memref<5x2x32x32xf32, #tpu.memory_space<vmem>>, vector<1x1x32x32xf32>
    %45 = vector.shape_cast %44 : vector<1x1x32x32xf32> to vector<32x32xf32>
    %cst_28 = arith.constant dense<0.000000e+00> : vector<8x32xf32>
    %46 = tpu.matmul %43, %45, %cst_28 {dimension_numbers = #tpu.dot_dimension_numbers<[1], [0], [0], [1], [0, 0, 1, 1], [], []>} : vector<8x32xf32>, vector<32x32xf32>, vector<8x32xf32> -> vector<8x32xf32>
    %c0_29 = arith.constant 0 : index
    %c0_30 = arith.constant 0 : index
    %c0_31 = arith.constant 0 : index
    %c0_32 = arith.constant 0 : index
    %47 = vector.load %arg8[%c0_29, %c0_30, %c0_31, %c0_32] : memref<5x2x1x32xf32, #tpu.memory_space<vmem>>, vector<1x1x1x32xf32>
    %48 = vector.shape_cast %47 : vector<1x1x1x32xf32> to vector<1x32xf32>
    %49 = vector.broadcast %48 : vector<1x32xf32> to vector<8x32xf32>
    %50 = arith.addf %46, %49 : vector<8x32xf32>
    %cst_33 = arith.constant 0.000000e+00 : f32
    %51 = vector.broadcast %cst_33 : f32 to vector<8x32xf32>
    %52 = arith.maximumf %50, %51 : vector<8x32xf32>
    %c0_34 = arith.constant 0 : index
    %c1 = arith.constant 1 : index
    %c0_35 = arith.constant 0 : index
    %c0_36 = arith.constant 0 : index
    %53 = vector.load %arg7[%c0_34, %c1, %c0_35, %c0_36] : memref<5x2x32x32xf32, #tpu.memory_space<vmem>>, vector<1x1x32x32xf32>
    %54 = vector.shape_cast %53 : vector<1x1x32x32xf32> to vector<32x32xf32>
    %cst_37 = arith.constant dense<0.000000e+00> : vector<8x32xf32>
    %55 = tpu.matmul %52, %54, %cst_37 {dimension_numbers = #tpu.dot_dimension_numbers<[1], [0], [0], [1], [0, 0, 1, 1], [], []>} : vector<8x32xf32>, vector<32x32xf32>, vector<8x32xf32> -> vector<8x32xf32>
    %c0_38 = arith.constant 0 : index
    %c1_39 = arith.constant 1 : index
    %c0_40 = arith.constant 0 : index
    %c0_41 = arith.constant 0 : index
    %56 = vector.load %arg8[%c0_38, %c1_39, %c0_40, %c0_41] : memref<5x2x1x32xf32, #tpu.memory_space<vmem>>, vector<1x1x1x32xf32>
    %57 = vector.shape_cast %56 : vector<1x1x1x32xf32> to vector<1x32xf32>
    %58 = vector.broadcast %57 : vector<1x32xf32> to vector<8x32xf32>
    %59 = arith.addf %55, %58 : vector<8x32xf32>
    %60 = arith.addf %41, %59 : vector<8x32xf32>
    %61 = vector.extract_strided_slice %39 {offsets = [0, 32], sizes = [8, 32], strides = [1, 1]} : vector<8x160xf32> to vector<8x32xf32>
    %62 = arith.addf %60, %61 : vector<8x32xf32>
    %cst_42 = arith.constant 0.000000e+00 : f32
    %63 = vector.broadcast %cst_42 : f32 to vector<8x32xf32>
    %64 = arith.maximumf %62, %63 : vector<8x32xf32>
    %c1_43 = arith.constant 1 : index
    %c0_44 = arith.constant 0 : index
    %c0_45 = arith.constant 0 : index
    %c0_46 = arith.constant 0 : index
    %65 = vector.load %arg7[%c1_43, %c0_44, %c0_45, %c0_46] : memref<5x2x32x32xf32, #tpu.memory_space<vmem>>, vector<1x1x32x32xf32>
    %66 = vector.shape_cast %65 : vector<1x1x32x32xf32> to vector<32x32xf32>
    %cst_47 = arith.constant dense<0.000000e+00> : vector<8x32xf32>
    %67 = tpu.matmul %64, %66, %cst_47 {dimension_numbers = #tpu.dot_dimension_numbers<[1], [0], [0], [1], [0, 0, 1, 1], [], []>} : vector<8x32xf32>, vector<32x32xf32>, vector<8x32xf32> -> vector<8x32xf32>
    %c1_48 = arith.constant 1 : index
    %c0_49 = arith.constant 0 : index
    %c0_50 = arith.constant 0 : index
    %c0_51 = arith.constant 0 : index
    %68 = vector.load %arg8[%c1_48, %c0_49, %c0_50, %c0_51] : memref<5x2x1x32xf32, #tpu.memory_space<vmem>>, vector<1x1x1x32xf32>
    %69 = vector.shape_cast %68 : vector<1x1x1x32xf32> to vector<1x32xf32>
    %70 = vector.broadcast %69 : vector<1x32xf32> to vector<8x32xf32>
    %71 = arith.addf %67, %70 : vector<8x32xf32>
    %cst_52 = arith.constant 0.000000e+00 : f32
    %72 = vector.broadcast %cst_52 : f32 to vector<8x32xf32>
    %73 = arith.maximumf %71, %72 : vector<8x32xf32>
    %c1_53 = arith.constant 1 : index
    %c1_54 = arith.constant 1 : index
    %c0_55 = arith.constant 0 : index
    %c0_56 = arith.constant 0 : index
    %74 = vector.load %arg7[%c1_53, %c1_54, %c0_55, %c0_56] : memref<5x2x32x32xf32, #tpu.memory_space<vmem>>, vector<1x1x32x32xf32>
    %75 = vector.shape_cast %74 : vector<1x1x32x32xf32> to vector<32x32xf32>
    %cst_57 = arith.constant dense<0.000000e+00> : vector<8x32xf32>
    %76 = tpu.matmul %73, %75, %cst_57 {dimension_numbers = #tpu.dot_dimension_numbers<[1], [0], [0], [1], [0, 0, 1, 1], [], []>} : vector<8x32xf32>, vector<32x32xf32>, vector<8x32xf32> -> vector<8x32xf32>
    %c1_58 = arith.constant 1 : index
    %c1_59 = arith.constant 1 : index
    %c0_60 = arith.constant 0 : index
    %c0_61 = arith.constant 0 : index
    %77 = vector.load %arg8[%c1_58, %c1_59, %c0_60, %c0_61] : memref<5x2x1x32xf32, #tpu.memory_space<vmem>>, vector<1x1x1x32xf32>
    %78 = vector.shape_cast %77 : vector<1x1x1x32xf32> to vector<1x32xf32>
    %79 = vector.broadcast %78 : vector<1x32xf32> to vector<8x32xf32>
    %80 = arith.addf %76, %79 : vector<8x32xf32>
    %81 = arith.addf %62, %80 : vector<8x32xf32>
    %82 = vector.extract_strided_slice %39 {offsets = [0, 64], sizes = [8, 32], strides = [1, 1]} : vector<8x160xf32> to vector<8x32xf32>
    %83 = arith.addf %81, %82 : vector<8x32xf32>
    %cst_62 = arith.constant 0.000000e+00 : f32
    %84 = vector.broadcast %cst_62 : f32 to vector<8x32xf32>
    %85 = arith.maximumf %83, %84 : vector<8x32xf32>
    %c2 = arith.constant 2 : index
    %c0_63 = arith.constant 0 : index
    %c0_64 = arith.constant 0 : index
    %c0_65 = arith.constant 0 : index
    %86 = vector.load %arg7[%c2, %c0_63, %c0_64, %c0_65] : memref<5x2x32x32xf32, #tpu.memory_space<vmem>>, vector<1x1x32x32xf32>
    %87 = vector.shape_cast %86 : vector<1x1x32x32xf32> to vector<32x32xf32>
    %cst_66 = arith.constant dense<0.000000e+00> : vector<8x32xf32>
    %88 = tpu.matmul %85, %87, %cst_66 {dimension_numbers = #tpu.dot_dimension_numbers<[1], [0], [0], [1], [0, 0, 1, 1], [], []>} : vector<8x32xf32>, vector<32x32xf32>, vector<8x32xf32> -> vector<8x32xf32>
    %c2_67 = arith.constant 2 : index
    %c0_68 = arith.constant 0 : index
    %c0_69 = arith.constant 0 : index
    %c0_70 = arith.constant 0 : index
    %89 = vector.load %arg8[%c2_67, %c0_68, %c0_69, %c0_70] : memref<5x2x1x32xf32, #tpu.memory_space<vmem>>, vector<1x1x1x32xf32>
    %90 = vector.shape_cast %89 : vector<1x1x1x32xf32> to vector<1x32xf32>
    %91 = vector.broadcast %90 : vector<1x32xf32> to vector<8x32xf32>
    %92 = arith.addf %88, %91 : vector<8x32xf32>
    %cst_71 = arith.constant 0.000000e+00 : f32
    %93 = vector.broadcast %cst_71 : f32 to vector<8x32xf32>
    %94 = arith.maximumf %92, %93 : vector<8x32xf32>
    %c2_72 = arith.constant 2 : index
    %c1_73 = arith.constant 1 : index
    %c0_74 = arith.constant 0 : index
    %c0_75 = arith.constant 0 : index
    %95 = vector.load %arg7[%c2_72, %c1_73, %c0_74, %c0_75] : memref<5x2x32x32xf32, #tpu.memory_space<vmem>>, vector<1x1x32x32xf32>
    %96 = vector.shape_cast %95 : vector<1x1x32x32xf32> to vector<32x32xf32>
    %cst_76 = arith.constant dense<0.000000e+00> : vector<8x32xf32>
    %97 = tpu.matmul %94, %96, %cst_76 {dimension_numbers = #tpu.dot_dimension_numbers<[1], [0], [0], [1], [0, 0, 1, 1], [], []>} : vector<8x32xf32>, vector<32x32xf32>, vector<8x32xf32> -> vector<8x32xf32>
    %c2_77 = arith.constant 2 : index
    %c1_78 = arith.constant 1 : index
    %c0_79 = arith.constant 0 : index
    %c0_80 = arith.constant 0 : index
    %98 = vector.load %arg8[%c2_77, %c1_78, %c0_79, %c0_80] : memref<5x2x1x32xf32, #tpu.memory_space<vmem>>, vector<1x1x1x32xf32>
    %99 = vector.shape_cast %98 : vector<1x1x1x32xf32> to vector<1x32xf32>
    %100 = vector.broadcast %99 : vector<1x32xf32> to vector<8x32xf32>
    %101 = arith.addf %97, %100 : vector<8x32xf32>
    %102 = arith.addf %83, %101 : vector<8x32xf32>
    %103 = vector.extract_strided_slice %39 {offsets = [0, 96], sizes = [8, 32], strides = [1, 1]} : vector<8x160xf32> to vector<8x32xf32>
    %104 = arith.addf %102, %103 : vector<8x32xf32>
    %cst_81 = arith.constant 0.000000e+00 : f32
    %105 = vector.broadcast %cst_81 : f32 to vector<8x32xf32>
    %106 = arith.maximumf %104, %105 : vector<8x32xf32>
    %c3 = arith.constant 3 : index
    %c0_82 = arith.constant 0 : index
    %c0_83 = arith.constant 0 : index
    %c0_84 = arith.constant 0 : index
    %107 = vector.load %arg7[%c3, %c0_82, %c0_83, %c0_84] : memref<5x2x32x32xf32, #tpu.memory_space<vmem>>, vector<1x1x32x32xf32>
    %108 = vector.shape_cast %107 : vector<1x1x32x32xf32> to vector<32x32xf32>
    %cst_85 = arith.constant dense<0.000000e+00> : vector<8x32xf32>
    %109 = tpu.matmul %106, %108, %cst_85 {dimension_numbers = #tpu.dot_dimension_numbers<[1], [0], [0], [1], [0, 0, 1, 1], [], []>} : vector<8x32xf32>, vector<32x32xf32>, vector<8x32xf32> -> vector<8x32xf32>
    %c3_86 = arith.constant 3 : index
    %c0_87 = arith.constant 0 : index
    %c0_88 = arith.constant 0 : index
    %c0_89 = arith.constant 0 : index
    %110 = vector.load %arg8[%c3_86, %c0_87, %c0_88, %c0_89] : memref<5x2x1x32xf32, #tpu.memory_space<vmem>>, vector<1x1x1x32xf32>
    %111 = vector.shape_cast %110 : vector<1x1x1x32xf32> to vector<1x32xf32>
    %112 = vector.broadcast %111 : vector<1x32xf32> to vector<8x32xf32>
    %113 = arith.addf %109, %112 : vector<8x32xf32>
    %cst_90 = arith.constant 0.000000e+00 : f32
    %114 = vector.broadcast %cst_90 : f32 to vector<8x32xf32>
    %115 = arith.maximumf %113, %114 : vector<8x32xf32>
    %c3_91 = arith.constant 3 : index
    %c1_92 = arith.constant 1 : index
    %c0_93 = arith.constant 0 : index
    %c0_94 = arith.constant 0 : index
    %116 = vector.load %arg7[%c3_91, %c1_92, %c0_93, %c0_94] : memref<5x2x32x32xf32, #tpu.memory_space<vmem>>, vector<1x1x32x32xf32>
    %117 = vector.shape_cast %116 : vector<1x1x32x32xf32> to vector<32x32xf32>
    %cst_95 = arith.constant dense<0.000000e+00> : vector<8x32xf32>
    %118 = tpu.matmul %115, %117, %cst_95 {dimension_numbers = #tpu.dot_dimension_numbers<[1], [0], [0], [1], [0, 0, 1, 1], [], []>} : vector<8x32xf32>, vector<32x32xf32>, vector<8x32xf32> -> vector<8x32xf32>
    %c3_96 = arith.constant 3 : index
    %c1_97 = arith.constant 1 : index
    %c0_98 = arith.constant 0 : index
    %c0_99 = arith.constant 0 : index
    %119 = vector.load %arg8[%c3_96, %c1_97, %c0_98, %c0_99] : memref<5x2x1x32xf32, #tpu.memory_space<vmem>>, vector<1x1x1x32xf32>
    %120 = vector.shape_cast %119 : vector<1x1x1x32xf32> to vector<1x32xf32>
    %121 = vector.broadcast %120 : vector<1x32xf32> to vector<8x32xf32>
    %122 = arith.addf %118, %121 : vector<8x32xf32>
    %123 = arith.addf %104, %122 : vector<8x32xf32>
    %124 = vector.extract_strided_slice %39 {offsets = [0, 128], sizes = [8, 32], strides = [1, 1]} : vector<8x160xf32> to vector<8x32xf32>
    %125 = arith.addf %123, %124 : vector<8x32xf32>
    %cst_100 = arith.constant 0.000000e+00 : f32
    %126 = vector.broadcast %cst_100 : f32 to vector<8x32xf32>
    %127 = arith.maximumf %125, %126 : vector<8x32xf32>
    %c4 = arith.constant 4 : index
    %c0_101 = arith.constant 0 : index
    %c0_102 = arith.constant 0 : index
    %c0_103 = arith.constant 0 : index
    %128 = vector.load %arg7[%c4, %c0_101, %c0_102, %c0_103] : memref<5x2x32x32xf32, #tpu.memory_space<vmem>>, vector<1x1x32x32xf32>
    %129 = vector.shape_cast %128 : vector<1x1x32x32xf32> to vector<32x32xf32>
    %cst_104 = arith.constant dense<0.000000e+00> : vector<8x32xf32>
    %130 = tpu.matmul %127, %129, %cst_104 {dimension_numbers = #tpu.dot_dimension_numbers<[1], [0], [0], [1], [0, 0, 1, 1], [], []>} : vector<8x32xf32>, vector<32x32xf32>, vector<8x32xf32> -> vector<8x32xf32>
    %c4_105 = arith.constant 4 : index
    %c0_106 = arith.constant 0 : index
    %c0_107 = arith.constant 0 : index
    %c0_108 = arith.constant 0 : index
    %131 = vector.load %arg8[%c4_105, %c0_106, %c0_107, %c0_108] : memref<5x2x1x32xf32, #tpu.memory_space<vmem>>, vector<1x1x1x32xf32>
    %132 = vector.shape_cast %131 : vector<1x1x1x32xf32> to vector<1x32xf32>
    %133 = vector.broadcast %132 : vector<1x32xf32> to vector<8x32xf32>
    %134 = arith.addf %130, %133 : vector<8x32xf32>
    %cst_109 = arith.constant 0.000000e+00 : f32
    %135 = vector.broadcast %cst_109 : f32 to vector<8x32xf32>
    %136 = arith.maximumf %134, %135 : vector<8x32xf32>
    %c4_110 = arith.constant 4 : index
    %c1_111 = arith.constant 1 : index
    %c0_112 = arith.constant 0 : index
    %c0_113 = arith.constant 0 : index
    %137 = vector.load %arg7[%c4_110, %c1_111, %c0_112, %c0_113] : memref<5x2x32x32xf32, #tpu.memory_space<vmem>>, vector<1x1x32x32xf32>
    %138 = vector.shape_cast %137 : vector<1x1x32x32xf32> to vector<32x32xf32>
    %cst_114 = arith.constant dense<0.000000e+00> : vector<8x32xf32>
    %139 = tpu.matmul %136, %138, %cst_114 {dimension_numbers = #tpu.dot_dimension_numbers<[1], [0], [0], [1], [0, 0, 1, 1], [], []>} : vector<8x32xf32>, vector<32x32xf32>, vector<8x32xf32> -> vector<8x32xf32>
    %c4_115 = arith.constant 4 : index
    %c1_116 = arith.constant 1 : index
    %c0_117 = arith.constant 0 : index
    %c0_118 = arith.constant 0 : index
    %140 = vector.load %arg8[%c4_115, %c1_116, %c0_117, %c0_118] : memref<5x2x1x32xf32, #tpu.memory_space<vmem>>, vector<1x1x1x32xf32>
    %141 = vector.shape_cast %140 : vector<1x1x1x32xf32> to vector<1x32xf32>
    %142 = vector.broadcast %141 : vector<1x32xf32> to vector<8x32xf32>
    %143 = arith.addf %139, %142 : vector<8x32xf32>
    %144 = arith.addf %125, %143 : vector<8x32xf32>
    %c0_119 = arith.constant 0 : index
    %c0_120 = arith.constant 0 : index
    %145 = vector.load %arg9[%c0_119, %c0_120] : memref<1x32xf32, #tpu.memory_space<vmem>>, vector<1x32xf32>
    %cst_121 = arith.constant 0.000000e+00 : f32
    %146 = vector.broadcast %cst_121 : f32 to vector<8x32xf32>
    %147 = arith.maximumf %144, %146 : vector<8x32xf32>
    %cst_122 = arith.constant dense<0.000000e+00> : vector<1x8xf32>
    %148 = tpu.matmul %145, %147, %cst_122 {dimension_numbers = #tpu.dot_dimension_numbers<[1], [1], [0], [0], [0, 0, 1, 0], [], []>} : vector<1x32xf32>, vector<8x32xf32>, vector<1x8xf32> -> vector<1x8xf32>
    %c0_123 = arith.constant 0 : index
    %c0_124 = arith.constant 0 : index
    %149 = vector.load %arg10[%c0_123, %c0_124] : memref<1x1xf32, #tpu.memory_space<vmem>>, vector<1x1xf32>
    %150 = vector.broadcast %149 : vector<1x1xf32> to vector<1x8xf32>
    %151 = arith.addf %148, %150 : vector<1x8xf32>
    %c0_125 = arith.constant 0 : index
    %c0_126 = arith.constant 0 : index
    %c0_127 = arith.constant 0 : index
    %152 = vector.load %arg11[%c0_125, %c0_126, %c0_127] : memref<1x1x8xf32, #tpu.memory_space<vmem>>, vector<1x1x8xf32>
    %153 = vector.shape_cast %152 : vector<1x1x8xf32> to vector<1x8xf32>
    %154 = vector.shape_cast %151 : vector<1x8xf32> to vector<1x1x8xf32>
    tpu.vector_store %arg11[%c0_125, %c0_126, %c0_127], %154 {strides = array<i32>} : memref<1x1x8xf32, #tpu.memory_space<vmem>>, vector<1x1x8xf32>,
    return
  }
  func.func @transform_0(%arg0: i32, %arg1: i32) -> (i32, i32, i32) {
    %c0_i32 = arith.constant 0 : i32
    %c0_i32_0 = arith.constant 0 : i32
    return %arg0, %arg1, %c0_i32 : i32, i32, i32
  }
  func.func @transform_1(%arg0: i32, %arg1: i32) -> (i32, i32, i32) {
    %c0_i32 = arith.constant 0 : i32
    %c0_i32_0 = arith.constant 0 : i32
    %c0_i32_1 = arith.constant 0 : i32
    return %arg0, %c0_i32, %c0_i32_0 : i32, i32, i32
  }
  func.func @transform_2(%arg0: i32, %arg1: i32) -> (i32, i32, i32) {
    %c0_i32 = arith.constant 0 : i32
    %c0_i32_0 = arith.constant 0 : i32
    %c0_i32_1 = arith.constant 0 : i32
    return %arg0, %c0_i32, %c0_i32_0 : i32, i32, i32
  }
  func.func @transform_3(%arg0: i32, %arg1: i32) -> (i32, i32) {
    %c0_i32 = arith.constant 0 : i32
    %c0_i32_0 = arith.constant 0 : i32
    %c0_i32_1 = arith.constant 0 : i32
    return %c0_i32, %c0_i32_0 : i32, i32
  }
  func.func @transform_4(%arg0: i32, %arg1: i32) -> (i32, i32) {
    %c0_i32 = arith.constant 0 : i32
    %c0_i32_0 = arith.constant 0 : i32
    %c0_i32_1 = arith.constant 0 : i32
    return %c0_i32, %c0_i32_0 : i32, i32
  }
  func.func @transform_5(%arg0: i32, %arg1: i32) -> (i32, i32, i32, i32) {
    %c0_i32 = arith.constant 0 : i32
    %c0_i32_0 = arith.constant 0 : i32
    %c0_i32_1 = arith.constant 0 : i32
    %c0_i32_2 = arith.constant 0 : i32
    %c0_i32_3 = arith.constant 0 : i32
    return %c0_i32, %c0_i32_0, %c0_i32_1, %c0_i32_2 : i32, i32, i32, i32
  }
  func.func @transform_6(%arg0: i32, %arg1: i32) -> (i32, i32, i32, i32) {
    %c0_i32 = arith.constant 0 : i32
    %c0_i32_0 = arith.constant 0 : i32
    %c0_i32_1 = arith.constant 0 : i32
    %c0_i32_2 = arith.constant 0 : i32
    %c0_i32_3 = arith.constant 0 : i32
    return %c0_i32, %c0_i32_0, %c0_i32_1, %c0_i32_2 : i32, i32, i32, i32
  }
  func.func @transform_7(%arg0: i32, %arg1: i32) -> (i32, i32) {
    %c0_i32 = arith.constant 0 : i32
    %c0_i32_0 = arith.constant 0 : i32
    %c0_i32_1 = arith.constant 0 : i32
    return %c0_i32, %c0_i32_0 : i32, i32
  }
  func.func @transform_8(%arg0: i32, %arg1: i32) -> (i32, i32) {
    %c0_i32 = arith.constant 0 : i32
    %c0_i32_0 = arith.constant 0 : i32
    %c0_i32_1 = arith.constant 0 : i32
    return %c0_i32, %c0_i32_0 : i32, i32
  }
  func.func @transform_9(%arg0: i32, %arg1: i32) -> (i32, i32, i32) {
    %c0_i32 = arith.constant 0 : i32
    %c0_i32_0 = arith.constant 0 : i32
    return %arg0, %c0_i32, %arg1 : i32, i32, i32
  }
}

</mosaic_0001>

<llo_original>
// kernel: tpu_custom_call.1
$region0: #{tpu_custom_call.1}
  #allocation0 [shape = 'u32[]', space=smem, size = 0x4, offset = 0x4, fixed_abs, tag = 'smem constant byte address 0x4 - core index']
  #allocation1 [shape = 'u32[144,128]{1,0:T(1,128)}', space=vmem, size = 0x12000, scoped, tag = 'internal scratch']
  #allocation2 [shape = 'f32[1,1]{1,0:T(1,128)S(1)}', space=vmem, size = 0x200, scoped, tag = 'scoped memory for tpu_custom_call.1']
  %s0 = inlined_call_operand.vmem [shape: f32[2,8,3], index: 0, kind: input, shape index: {}]
  %s1 = inlined_call_operand.hbm [shape: f32[2,4,16], index: 1, kind: input, shape index: {}]
  %s2 = inlined_call_operand.vmem [shape: f32[2,16,16], index: 2, kind: input, shape index: {}]
  %s3 = inlined_call_operand.hbm [shape: f32[4,32], index: 3, kind: input, shape index: {}]
  %s4 = inlined_call_operand.hbm [shape: f32[17,160], index: 4, kind: input, shape index: {}]
  %s5 = inlined_call_operand.hbm [shape: f32[5,2,32,32], index: 5, kind: input, shape index: {}]
  %s6 = inlined_call_operand.vmem [shape: f32[5,2,1,32], index: 6, kind: input, shape index: {}]
  %s7 = inlined_call_operand.vmem [shape: f32[1,32], index: 7, kind: input, shape index: {}]
  %s8 = inlined_call_operand.<no memory space> [shape: f32[1,1], index: 8, kind: input, shape index: {}]
  %s9 = inlined_call_operand.hbm [shape: f32[2,1,8], index: 9, kind: output, shape index: {}]
  %s10 = sld [smem:[#allocation0]]
  $region85: #{tpu_custom_call.1} parent=0
    _
  %s12 = ssub.s32 1, %s10
  %s13 = scalar_select 0, %s12, %s10
  %v14 = vstv %s8
  %15 = vst [vmem:[#allocation2] sm:$0x1] %v14
  $region1: #{tpu_custom_call.1} parent=0
    #allocation3 [shape = 'u8[4096]{0}', space=vmem, size = 0x1000, scoped, tag = 'input window, operand 1']
    #allocation4 [shape = 's32[2]{0}', space=sflag, size = 0x8, scoped, tag = 'scoped memory for tpu_custom_call.1']
    #allocation5 [shape = 's32[2]{0}', space=sflag, size = 0x8, scoped, tag = 'scoped memory for tpu_custom_call.1']
    #allocation6 [shape = 'u8[2048]{0}', space=vmem, size = 0x800, scoped, tag = 'input window, operand 3, single buffered']
    #allocation7 [shape = 's32[1]{0}', space=sflag, size = 0x4, scoped, tag = 'scoped memory for tpu_custom_call.1']
    #allocation8 [shape = 'u8[24576]{0}', space=vmem, size = 0x6000, scoped, tag = 'input window, operand 4, single buffered']
    #allocation9 [shape = 'u8[163840]{0}', space=vmem, size = 0x28000, scoped, tag = 'input window, operand 5, single buffered']
    #allocation10 [shape = 's32[1]{0}', space=sflag, size = 0x4, scoped, tag = 'scoped memory for tpu_custom_call.1']
    #allocation11 [shape = 'u8[1024]{0}', space=vmem, size = 0x400, scoped, tag = 'output window, operand 0']
    %16 = vsyncpa [#allocation4], 0
    %s17 = scalar_lea.sflag [#allocation4], 1
    %18 = vsyncpa %s17, 0
    %19 = vsyncpa [#allocation7], 0
    %20 = vsyncpa [#allocation10], 0
    %21 = vsyncpa [#allocation5], 0
    %s22 = scalar_lea.sflag [#allocation5], 1
    %23 = vsyncpa %s22, 0
    loop: start=0, step=1, limit=4
    $region2: #{tpu_custom_call.1} parent=1 // loop_pre_header
      _
    $region3: #{tpu_custom_call.1} parent=1 // loop_header
      %s25 = sphi 0, %s29
      %p26 = scmp.ge.s32.totalorder %s25, 4
      %s32 = sphi 0, %s44
      %s33 = sphi 0, %s40
      %s34 = sphi 0, %s32
      %s35 = sphi 0, %s33
      %s36 = sphi 0, %s34
      %s37 = sphi 0, %s35
      %s49 = sphi 0, %s51
      %s52 = sphi 0, %s49
      %s53 = sphi 0, %s52
      %s69 = sphi 0, %s53
      %s75 = sphi 0, %s77
      %s78 = sphi 0, %s75
      %s79 = sphi 0, %s78
      %s95 = sphi 0, %s79
      %s101 = sphi 0, %s103
      %s104 = sphi 0, %s101
      %s105 = sphi 0, %s104
      %s121 = sphi 0, %s105
      %s125 = sphi 0, %s125
      %s127 = sphi 0, %s125
      %s128 = sphi 0, %s127
      %s142 = sphi 0, %s128
      %s146 = sphi 0, %s146
      %s148 = sphi 0, %s146
      %s149 = sphi 0, %s148
      %s163 = sphi 0, %s149
      %s167 = sphi 0, %s167
      %s169 = sphi 0, %s167
      %s170 = sphi 0, %s169
      %s184 = sphi 0, %s170
      %s188 = sphi 0, %s188
      %s190 = sphi 0, %s188
      %s191 = sphi 0, %s190
      %s205 = sphi 0, %s191
      %s209 = sphi 0, %s209
      %s211 = sphi 0, %s209
      %s212 = sphi 0, %s211
      %s226 = sphi 0, %s212
      %s230 = sphi 0, %s230
      %s232 = sphi 0, %s230
      %s233 = sphi 0, %s232
      %s247 = sphi 0, %s233
      %s255 = sphi 0, %s257
      %s258 = sphi 0, %s255
      %s259 = sphi 0, %s258
      %s275 = sphi 0, %s259
    $region4: #{tpu_custom_call.1} parent=1 // loop_header_branch
      %28 = sbr.rel (%p26) target = $region8
    $region5: #{tpu_custom_call.1} parent=1 // loop_body
      %s30 = ssub.s32 %s25, 1
      %s31 = ssub.s32 %s25, 2
      %s38 = sadd.s32 1, %s33
      %p39 = scmp.ge.s32.totalorder %s38, 1
      %s40 = scalar_select %p39, 0, %s38
      %s41 = sadd.s32 1, %s32
      %s42 = scalar_select %p39, %s41, %s32
      %p43 = scmp.ge.s32.totalorder %s42, 2
      %s44 = scalar_select %p43, 0, %s42
      %s45 = ssub.s32 %s32, %s44
      %s46 = ssub.s32 %s33, %s40
      %s47 = sor.u32 %s45, %s46
      %p48 = scmp.eq.s32.totalorder %s47, 0
      %s50 = sadd.s32 %s49, 1
      %s51 = scalar_select %p48, %s49, %s50
      %p54 = pneg %p48
      %p55 = scmp.eq.s32.totalorder %s25, 1
      %p56 = por %p54, %p55
      %p57 = scmp.ne.s32.totalorder %s49, %s52
      %p58 = scmp.eq.s32.totalorder %s25, 0
      %p59 = por %p57, %p58
      %p60 = scmp.ne.s32.totalorder %s49, %s52
      %p61 = scmp.eq.s32.totalorder %s30, 1
      %p62 = por %p60, %p61
      %p63 = scmp.ne.s32.totalorder %s52, %s53
      %p64 = scmp.eq.s32.totalorder %s30, 0
      %p65 = por %p63, %p64
      %p66 = scmp.ne.s32.totalorder %s52, %s53
      %p67 = scmp.eq.s32.totalorder %s31, 1
      %p68 = por %p66, %p67
      %p70 = scmp.ne.s32.totalorder %s53, %s69
      %p71 = scmp.eq.s32.totalorder %s31, 0
      %p72 = por %p70, %p71
      %s73 = ssub.s32 %s32, %s44
      %p74 = scmp.eq.s32.totalorder %s73, 0
      %s76 = sadd.s32 %s75, 1
      %s77 = scalar_select %p74, %s75, %s76
      %p80 = pneg %p74
      %p81 = scmp.eq.s32.totalorder %s25, 1
      %p82 = por %p80, %p81
      %p83 = scmp.ne.s32.totalorder %s75, %s78
      %p84 = scmp.eq.s32.totalorder %s25, 0
      %p85 = por %p83, %p84
      %p86 = scmp.ne.s32.totalorder %s75, %s78
      %p87 = scmp.eq.s32.totalorder %s30, 1
      %p88 = por %p86, %p87
      %p89 = scmp.ne.s32.totalorder %s78, %s79
      %p90 = scmp.eq.s32.totalorder %s30, 0
      %p91 = por %p89, %p90
      %p92 = scmp.ne.s32.totalorder %s78, %s79
      %p93 = scmp.eq.s32.totalorder %s31, 1
      %p94 = por %p92, %p93
      %p96 = scmp.ne.s32.totalorder %s79, %s95
      %p97 = scmp.eq.s32.totalorder %s31, 0
      %p98 = por %p96, %p97
      %s99 = ssub.s32 %s32, %s44
      %p100 = scmp.eq.s32.totalorder %s99, 0
      %s102 = sadd.s32 %s101, 1
      %s103 = scalar_select %p100, %s101, %s102
      %p106 = pneg %p100
      %p107 = scmp.eq.s32.totalorder %s25, 1
      %p108 = por %p106, %p107
      %p109 = scmp.ne.s32.totalorder %s101, %s104
      %p110 = scmp.eq.s32.totalorder %s25, 0
      %p111 = por %p109, %p110
      %p112 = scmp.ne.s32.totalorder %s101, %s104
      %p113 = scmp.eq.s32.totalorder %s30, 1
      %p114 = por %p112, %p113
      %p115 = scmp.ne.s32.totalorder %s104, %s105
      %p116 = scmp.eq.s32.totalorder %s30, 0
      %p117 = por %p115, %p116
      %p118 = scmp.ne.s32.totalorder %s104, %s105
      %p119 = scmp.eq.s32.totalorder %s31, 1
      %p120 = por %p118, %p119
      %p122 = scmp.ne.s32.totalorder %s105, %s121
      %p123 = scmp.eq.s32.totalorder %s31, 0
      %p124 = por %p122, %p123
      %s126 = sadd.s32 %s125, 1
      %p129 = scmp.eq.s32.totalorder %s25, 1
      %p130 = scmp.ne.s32.totalorder %s125, %s127
      %p131 = scmp.eq.s32.totalorder %s25, 0
      %p132 = por %p130, %p131
      %p133 = scmp.ne.s32.totalorder %s125, %s127
      %p134 = scmp.eq.s32.totalorder %s30, 1
      %p135 = por %p133, %p134
      %p136 = scmp.ne.s32.totalorder %s127, %s128
      %p137 = scmp.eq.s32.totalorder %s30, 0
      %p138 = por %p136, %p137
      %p139 = scmp.ne.s32.totalorder %s127, %s128
      %p140 = scmp.eq.s32.totalorder %s31, 1
      %p141 = por %p139, %p140
      %p143 = scmp.ne.s32.totalorder %s128, %s142
      %p144 = scmp.eq.s32.totalorder %s31, 0
      %p145 = por %p143, %p144
      %s147 = sadd.s32 %s146, 1
      %p150 = scmp.eq.s32.totalorder %s25, 1
      %p151 = scmp.ne.s32.totalorder %s146, %s148
      %p152 = scmp.eq.s32.totalorder %s25, 0
      %p153 = por %p151, %p152
      %p154 = scmp.ne.s32.totalorder %s146, %s148
      %p155 = scmp.eq.s32.totalorder %s30, 1
      %p156 = por %p154, %p155
      %p157 = scmp.ne.s32.totalorder %s148, %s149
      %p158 = scmp.eq.s32.totalorder %s30, 0
      %p159 = por %p157, %p158
      %p160 = scmp.ne.s32.totalorder %s148, %s149
      %p161 = scmp.eq.s32.totalorder %s31, 1
      %p162 = por %p160, %p161
      %p164 = scmp.ne.s32.totalorder %s149, %s163
      %p165 = scmp.eq.s32.totalorder %s31, 0
      %p166 = por %p164, %p165
      %s168 = sadd.s32 %s167, 1
      %p171 = scmp.eq.s32.totalorder %s25, 1
      %p172 = scmp.ne.s32.totalorder %s167, %s169
      %p173 = scmp.eq.s32.totalorder %s25, 0
      %p174 = por %p172, %p173
      %p175 = scmp.ne.s32.totalorder %s167, %s169
      %p176 = scmp.eq.s32.totalorder %s30, 1
      %p177 = por %p175, %p176
      %p178 = scmp.ne.s32.totalorder %s169, %s170
      %p179 = scmp.eq.s32.totalorder %s30, 0
      %p180 = por %p178, %p179
      %p181 = scmp.ne.s32.totalorder %s169, %s170
      %p182 = scmp.eq.s32.totalorder %s31, 1
      %p183 = por %p181, %p182
      %p185 = scmp.ne.s32.totalorder %s170, %s184
      %p186 = scmp.eq.s32.totalorder %s31, 0
      %p187 = por %p185, %p186
      %s189 = sadd.s32 %s188, 1
      %p192 = scmp.eq.s32.totalorder %s25, 1
      %p193 = scmp.ne.s32.totalorder %s188, %s190
      %p194 = scmp.eq.s32.totalorder %s25, 0
      %p195 = por %p193, %p194
      %p196 = scmp.ne.s32.totalorder %s188, %s190
      %p197 = scmp.eq.s32.totalorder %s30, 1
      %p198 = por %p196, %p197
      %p199 = scmp.ne.s32.totalorder %s190, %s191
      %p200 = scmp.eq.s32.totalorder %s30, 0
      %p201 = por %p199, %p200
      %p202 = scmp.ne.s32.totalorder %s190, %s191
      %p203 = scmp.eq.s32.totalorder %s31, 1
      %p204 = por %p202, %p203
      %p206 = scmp.ne.s32.totalorder %s191, %s205
      %p207 = scmp.eq.s32.totalorder %s31, 0
      %p208 = por %p206, %p207
      %s210 = sadd.s32 %s209, 1
      %p213 = scmp.eq.s32.totalorder %s25, 1
      %p214 = scmp.ne.s32.totalorder %s209, %s211
      %p215 = scmp.eq.s32.totalorder %s25, 0
      %p216 = por %p214, %p215
      %p217 = scmp.ne.s32.totalorder %s209, %s211
      %p218 = scmp.eq.s32.totalorder %s30, 1
      %p219 = por %p217, %p218
      %p220 = scmp.ne.s32.totalorder %s211, %s212
      %p221 = scmp.eq.s32.totalorder %s30, 0
      %p222 = por %p220, %p221
      %p223 = scmp.ne.s32.totalorder %s211, %s212
      %p224 = scmp.eq.s32.totalorder %s31, 1
      %p225 = por %p223, %p224
      %p227 = scmp.ne.s32.totalorder %s212, %s226
      %p228 = scmp.eq.s32.totalorder %s31, 0
      %p229 = por %p227, %p228
      %s231 = sadd.s32 %s230, 1
      %p234 = scmp.eq.s32.totalorder %s25, 1
      %p235 = scmp.ne.s32.totalorder %s230, %s232
      %p236 = scmp.eq.s32.totalorder %s25, 0
      %p237 = por %p235, %p236
      %p238 = scmp.ne.s32.totalorder %s230, %s232
      %p239 = scmp.eq.s32.totalorder %s30, 1
      %p240 = por %p238, %p239
      %p241 = scmp.ne.s32.totalorder %s232, %s233
      %p242 = scmp.eq.s32.totalorder %s30, 0
      %p243 = por %p241, %p242
      %p244 = scmp.ne.s32.totalorder %s232, %s233
      %p245 = scmp.eq.s32.totalorder %s31, 1
      %p246 = por %p244, %p245
      %p248 = scmp.ne.s32.totalorder %s233, %s247
      %p249 = scmp.eq.s32.totalorder %s31, 0
      %p250 = por %p248, %p249
      %s251 = ssub.s32 %s32, %s44
      %s252 = ssub.s32 %s33, %s40
      %s253 = sor.u32 %s251, %s252
      %p254 = scmp.eq.s32.totalorder %s253, 0
      %s256 = sadd.s32 %s255, 1
      %s257 = scalar_select %p254, %s255, %s256
      %p260 = pneg %p254
      %p261 = scmp.eq.s32.totalorder %s25, 1
      %p262 = por %p260, %p261
      %p263 = scmp.ne.s32.totalorder %s255, %s258
      %p264 = scmp.eq.s32.totalorder %s25, 0
      %p265 = por %p263, %p264
      %p266 = scmp.ne.s32.totalorder %s255, %s258
      %p267 = scmp.eq.s32.totalorder %s30, 1
      %p268 = por %p266, %p267
      %p269 = scmp.ne.s32.totalorder %s258, %s259
      %p270 = scmp.eq.s32.totalorder %s30, 0
      %p271 = por %p269, %p270
      %p272 = scmp.ne.s32.totalorder %s258, %s259
      %p273 = scmp.eq.s32.totalorder %s31, 1
      %p274 = por %p272, %p273
      %p276 = scmp.ne.s32.totalorder %s259, %s275
      %p277 = scmp.eq.s32.totalorder %s31, 0
      %p278 = por %p276, %p277
      %p279 = scmp.le.s32.totalorder 1, %s25
      %p280 = scmp.lt.s32.totalorder %s25, 3
      %p281 = pnand %p279, %p280
      %p282 = pneg %p281
      // Predicated region
      $region9: #{tpu_custom_call.1} parent=5 // pred_check
        _
      $region10: #{tpu_custom_call.1} parent=5 // pred_check_branch
        %284 = sbr.rel (%p281) target = $region12
      $region11: #{tpu_custom_call.1} parent=5 // pred_region
        %s285 = ssub.s32 %s25, 1
        // Predicated region
        $region13: #{tpu_custom_call.1} parent=11 // pred_check
          %p286 = pneg %p138
        $region14: #{tpu_custom_call.1} parent=11 // pred_check_branch
          %288 = sbr.rel (%p286) target = $region16
        $region15: #{tpu_custom_call.1} parent=11 // pred_region
          %s290 = ssub.s32 64, 64
          %291 = vsyncadd [#allocation7], %s290
          %s293 = sshll.u32 [#allocation6], 4
          %s294 = int_to_ptr.vmem [resolvable:$true] %s293
          %296 = dma.hbm_to_vmem [thread:$0]  %s3, 64, %s294, [#allocation7]
        $region16: #{tpu_custom_call.1} parent=11 // pred_fallthru
          _
        // Predicated region
        $region17: #{tpu_custom_call.1} parent=11 // pred_check
          %p297 = pneg %p159
        $region18: #{tpu_custom_call.1} parent=11 // pred_check_branch
          %299 = sbr.rel (%p297) target = $region20
        $region19: #{tpu_custom_call.1} parent=11 // pred_region
          %s301 = ssub.s32 768, 768
          %302 = vsyncadd [#allocation7], %s301
          %s303 = sshll.u32 [#allocation8], 4
          %s304 = int_to_ptr.vmem [resolvable:$true] %s303
          %309 = dma.hbm_to_vmem [thread:$0]  %s4, 768, %s304, [#allocation7], 256, 256, 16
        $region20: #{tpu_custom_call.1} parent=11 // pred_fallthru
          _
        // Predicated region
        $region21: #{tpu_custom_call.1} parent=11 // pred_check
          %p310 = pneg %p180
        $region22: #{tpu_custom_call.1} parent=11 // pred_check_branch
          %312 = sbr.rel (%p310) target = $region24
        $region23: #{tpu_custom_call.1} parent=11 // pred_region
          %s314 = ssub.s32 5120, 5120
          %315 = vsyncadd [#allocation10], %s314
          %s316 = sshll.u32 [#allocation9], 4
          %s317 = int_to_ptr.vmem [resolvable:$true] %s316
          %322 = dma.hbm_to_vmem [thread:$0]  %s5, 5120, %s317, [#allocation10], 128, 128, 8
        $region24: #{tpu_custom_call.1} parent=11 // pred_fallthru
          _
        // Predicated region
        $region25: #{tpu_custom_call.1} parent=11 // pred_check
          %p323 = pneg %p201
        $region26: #{tpu_custom_call.1} parent=11 // pred_check_branch
          %325 = sbr.rel (%p323) target = $region28
        $region27: #{tpu_custom_call.1} parent=11 // pred_region
          _
        $region28: #{tpu_custom_call.1} parent=11 // pred_fallthru
          _
        // Predicated region
        $region29: #{tpu_custom_call.1} parent=11 // pred_check
          %p326 = pneg %p222
        $region30: #{tpu_custom_call.1} parent=11 // pred_check_branch
          %328 = sbr.rel (%p326) target = $region32
        $region31: #{tpu_custom_call.1} parent=11 // pred_region
          _
        $region32: #{tpu_custom_call.1} parent=11 // pred_fallthru
          _
        // Predicated region
        $region33: #{tpu_custom_call.1} parent=11 // pred_check
          %p329 = pneg %p243
        $region34: #{tpu_custom_call.1} parent=11 // pred_check_branch
          %331 = sbr.rel (%p329) target = $region36
        $region35: #{tpu_custom_call.1} parent=11 // pred_region
          _
        $region36: #{tpu_custom_call.1} parent=11 // pred_fallthru
          _
      $region12: #{tpu_custom_call.1} parent=5 // pred_fallthru
        _
      %p332 = scmp.lt.s32.totalorder %s25, 2
      // Predicated region
      $region37: #{tpu_custom_call.1} parent=5 // pred_check
        %p333 = pneg %p332
      $region38: #{tpu_custom_call.1} parent=5 // pred_check_branch
        %335 = sbr.rel (%p333) target = $region40
      $region39: #{tpu_custom_call.1} parent=5 // pred_region
        // Predicated region
        $region41: #{tpu_custom_call.1} parent=39 // pred_check
          %p336 = pneg %p59
        $region42: #{tpu_custom_call.1} parent=39 // pred_check_branch
          %338 = sbr.rel (%p336) target = $region44
        $region43: #{tpu_custom_call.1} parent=39 // pred_region
          %p339 = scmp.lt.s32.totalorder %s32, 1
          %s340 = scalar_select %p339, %s32, 1
          %p341 = scmp.lt.s32.totalorder %s33, 0
          %s342 = scalar_select %p341, %s33, 0
          %s343 = sadd.s32 %s342, %s340
          %s344 = smul.addr %s343, 8
          %s345 = scalar_lea.vmem %s0, %s344
        $region44: #{tpu_custom_call.1} parent=39 // pred_fallthru
          _
        // Predicated region
        $region45: #{tpu_custom_call.1} parent=39 // pred_check
          %p346 = pneg %p85
        $region46: #{tpu_custom_call.1} parent=39 // pred_check_branch
          %348 = sbr.rel (%p346) target = $region48
        $region47: #{tpu_custom_call.1} parent=39 // pred_region
          %s349 = sand.u32 %s75, 1
          %s350 = scalar_lea.sflag [#allocation4], %s349
          %s351 = sand.u32 %s75, 1
          %s352 = smul.addr %s351, 4
          %s353 = scalar_lea.vmem [#allocation3], %s352
          %s355 = ssub.s32 64, 64
          %356 = vsyncadd %s350, %s355
          %s357 = smul.addr %s32, 64
          %s358 = scalar_lea.hbm %s1, %s357
          %s360 = sshll.u32 %s353, 4
          %s361 = int_to_ptr.vmem [resolvable:$true] %s360
          %363 = dma.hbm_to_vmem [thread:$0]  %s358, 64, %s361, %s350
        $region48: #{tpu_custom_call.1} parent=39 // pred_fallthru
          _
        // Predicated region
        $region49: #{tpu_custom_call.1} parent=39 // pred_check
          %p364 = pneg %p111
        $region50: #{tpu_custom_call.1} parent=39 // pred_check_branch
          %366 = sbr.rel (%p364) target = $region52
        $region51: #{tpu_custom_call.1} parent=39 // pred_region
          %p367 = scmp.lt.s32.totalorder %s32, 1
          %s368 = scalar_select %p367, %s32, 1
          %s369 = smul.addr %s368, 2
          %s370 = smul.addr %s369, 8
          %s371 = scalar_lea.vmem %s2, %s370
        $region52: #{tpu_custom_call.1} parent=39 // pred_fallthru
          _
      $region40: #{tpu_custom_call.1} parent=5 // pred_fallthru
        _
      %p372 = scmp.le.s32.totalorder 1, %s25
      %p373 = scmp.lt.s32.totalorder %s25, 3
      %p374 = pnand %p372, %p373
      %p375 = pneg %p374
      // Predicated region
      $region53: #{tpu_custom_call.1} parent=5 // pred_check
        _
      $region54: #{tpu_custom_call.1} parent=5 // pred_check_branch
        %377 = sbr.rel (%p374) target = $region56
      $region55: #{tpu_custom_call.1} parent=5 // pred_region
        %s378 = ssub.s32 %s25, 1
        %s379 = sand.u32 %s78, 1
        %s380 = scalar_lea.sflag [#allocation4], %s379
        %s381 = sand.u32 %s78, 1
        %s382 = smul.addr %s381, 4
        %s383 = scalar_lea.vmem [#allocation3], %s382
        // Predicated region
        $region57: #{tpu_custom_call.1} parent=55 // pred_check
          %p384 = pneg %p91
        $region58: #{tpu_custom_call.1} parent=55 // pred_check_branch
          %386 = sbr.rel (%p384) target = $region60
        $region59: #{tpu_custom_call.1} parent=55 // pred_region
          %387 = dma.done %s380, 64
        $region60: #{tpu_custom_call.1} parent=55 // pred_fallthru
          _
        // Predicated region
        $region61: #{tpu_custom_call.1} parent=55 // pred_check
          %p388 = pneg %p138
        $region62: #{tpu_custom_call.1} parent=55 // pred_check_branch
          %390 = sbr.rel (%p388) target = $region64
        $region63: #{tpu_custom_call.1} parent=55 // pred_region
          %391 = dma.done [#allocation7], 64
        $region64: #{tpu_custom_call.1} parent=55 // pred_fallthru
          _
        // Predicated region
        $region65: #{tpu_custom_call.1} parent=55 // pred_check
          %p392 = pneg %p159
        $region66: #{tpu_custom_call.1} parent=55 // pred_check_branch
          %394 = sbr.rel (%p392) target = $region68
        $region67: #{tpu_custom_call.1} parent=55 // pred_region
          %395 = dma.done [#allocation7], 768
        $region68: #{tpu_custom_call.1} parent=55 // pred_fallthru
          _
        // Predicated region
        $region69: #{tpu_custom_call.1} parent=55 // pred_check
          %p396 = pneg %p180
        $region70: #{tpu_custom_call.1} parent=55 // pred_check_branch
          %398 = sbr.rel (%p396) target = $region72
        $region71: #{tpu_custom_call.1} parent=55 // pred_region
          %399 = dma.done [#allocation10], 5120
        $region72: #{tpu_custom_call.1} parent=55 // pred_fallthru
          _
        %p400 = scmp.lt.s32.totalorder %s34, 1
        %s401 = scalar_select %p400, %s34, 1
        %p402 = scmp.lt.s32.totalorder %s35, 0
        %s403 = scalar_select %p402, %s35, 0
        %s404 = sadd.s32 %s403, %s401
        %s405 = smul.addr %s404, 8
        %s406 = scalar_lea.vmem %s0, %s405
        %p407 = pneg %p65
        %p408 = pneg %p62
        %s409 = sand.u32 %s78, 1
        %s410 = scalar_lea.sflag [#allocation4], %s409
        %s411 = sand.u32 %s78, 1
        %s412 = smul.addr %s411, 4
        %s413 = scalar_lea.vmem [#allocation3], %s412
        %p414 = pneg %p91
        %p415 = pneg %p88
        %p416 = scmp.lt.s32.totalorder %s34, 1
        %s417 = scalar_select %p416, %s34, 1
        %s418 = smul.addr %s417, 2
        %s419 = smul.addr %s418, 8
        %s420 = scalar_lea.vmem %s2, %s419
        %p421 = pneg %p117
        %p422 = pneg %p114
        %p423 = pneg %p138
        %p424 = pneg %p135
        %p425 = pneg %p159
        %p426 = pneg %p156
        %p427 = pneg %p180
        %p428 = pneg %p177
        %p429 = pneg %p201
        %p430 = pneg %p198
        %p431 = pneg %p222
        %p432 = pneg %p219
        %p433 = pneg %p243
        %p434 = pneg %p240
        %p435 = pneg %p271
        %p436 = pneg %p268
        %s437 = sand.u32 %s258, 1
        %s438 = scalar_lea.sflag [#allocation5], %s437
        %s439 = sand.u32 %s258, 1
        %s440 = scalar_lea.vmem [#allocation11], %s439
        %p441 = scmp.lt.s32.totalorder %s34, 1
        %s442 = scalar_select %p441, %s34, 1
        %p443 = scmp.lt.s32.totalorder %s35, 0
        %s444 = scalar_select %p443, %s35, 0
        %s445 = sadd.s32 %s444, %s442
        %s446 = smul.addr %s445, 8
        %s447 = scalar_lea.vmem %s0, %s446
        %p448 = scmp.lt.s32.totalorder %s34, 1
        %s449 = scalar_select %p448, %s34, 1
        %s450 = smul.addr %s449, 2
        %s451 = smul.addr %s450, 8
        %s452 = scalar_lea.vmem %s2, %s451
        %v453 = vld [vmem:[%s447] sm:$0xff]
        %v454 = vld [vmem:[%s383] sm:$0xf]
        %v455 = vld [vmem:[%s452] sm:$0xff]
        %v456 = vld [vmem:[%s452 + $0x8] sm:$0xff]
        %vm457 = vcmask 23552
        %v458 = vsel %vm457, %v453, 1.0
        %v459 = vmul.f32 %v453, %v453
        %v460 = vsel %vm457, %v459, 0.0
        %461 = vadd.xlane.f32.xlu0 %v460
        %v462 = vpop.xlane.xlu0 %461
        %vm463 = vcmask 31744
        %v465 = vsel %vm463, %v458, 0
        %vm467 = vcmask 1043456
        %v469 = vsel %vm467, %v454, 0
        %471 = vmatprep.subr.mxu0 0.0
        %472 = vmatpush1.msra.mxu0 %v469
        %473 = vmatprep.subr.mxu0 0.0
        %474 = vmatpush1.msra.mxu0 0.0
        %475 = vmatprep.subr.mxu0 0.0
        %476 = vmatpush1.msra.mxu0 0.0
        %477 = vmatprep.subr.mxu0 0.0
        %478 = vmatpush1.msra.mxu0 0.0
        %479 = vmatprep.subr.mxu0 0.0
        %480 = vmatpush1.msra.mxu0 0.0
        %481 = vmatprep.subr.mxu0 0.0
        %482 = vmatpush1.msra.mxu0 0.0
        %483 = vmatprep.subr.mxu0 0.0
        %484 = vmatpush1.msra.mxu0 0.0
        %485 = vmatprep.subr.mxu0 0.0
        %486 = vmatpush1.msra.mxu0 0.0
        %487 = vmatprep.subr.mxu0 0.0
        %488 = vmatpush1.msra.mxu0 0.0
        %489 = vmatprep.subr.mxu0 0.0
        %490 = vmatpush1.msra.mxu0 0.0
        %491 = vmatprep.subr.mxu0 0.0
        %492 = vmatpush1.msra.mxu0 0.0
        %493 = vmatprep.subr.mxu0 0.0
        %494 = vmatpush1.msra.mxu0 0.0
        %495 = vmatprep.subr.mxu0 0.0
        %496 = vmatpush1.msra.mxu0 0.0
        %497 = vmatprep.subr.mxu0 0.0
        %498 = vmatpush1.msra.mxu0 0.0
        %499 = vmatprep.subr.mxu0 0.0
        %500 = vmatpush1.msra.mxu0 0.0
        %501 = vmatprep.subr.mxu0 0.0
        %502 = vmatpush1.msra.mxu0 0.0
        %503 = vmatprep.subr.mxu0 0.0
        %504 = vmatpush1.msra.mxu0 0.0
        %505 = vmatprep.subr.mxu0 0.0
        %506 = vmatpush1.msra.mxu0 0.0
        %507 = vmatprep.subr.mxu0 0.0
        %508 = vmatpush1.msra.mxu0 0.0
        %509 = vmatprep.subr.mxu0 0.0
        %510 = vmatpush1.msra.mxu0 0.0
        %511 = vmatprep.subr.mxu0 0.0
        %512 = vmatpush1.msra.mxu0 0.0
        %513 = vmatprep.subr.mxu0 0.0
        %514 = vmatpush1.msra.mxu0 0.0
        %515 = vmatprep.subr.mxu0 0.0
        %516 = vmatpush1.msra.mxu0 0.0
        %517 = vmatprep.subr.mxu0 0.0
        %518 = vmatpush1.msra.mxu0 0.0
        %519 = vmatprep.subr.mxu0 0.0
        %520 = vmatpush1.msra.mxu0 0.0
        %521 = vmatprep.subr.mxu0 0.0
        %522 = vmatpush1.msra.mxu0 0.0
        %523 = vmatprep.subr.mxu0 0.0
        %524 = vmatpush1.msra.mxu0 0.0
        %525 = vmatprep.subr.mxu0 0.0
        %526 = vmatpush1.msra.mxu0 0.0
        %527 = vmatprep.subr.mxu0 0.0
        %528 = vmatpush1.msra.mxu0 0.0
        %529 = vmatprep.subr.mxu0 0.0
        %530 = vmatpush1.msra.mxu0 0.0
        %531 = vmatprep.subr.mxu0 0.0
        %532 = vmatpush1.msra.mxu0 0.0
        %533 = vmatprep.subr.mxu0 0.0
        %534 = vmatpush1.msra.mxu0 0.0
        %535 = vmatprep.mubr.f32.mxu0 0.0
        %536 = vmatmul.mubr.f32.gmra.mrb[0].mxu0 %v465
        %v537 = vpop.f32.mrb[0].mxu0
        %v538 = vadd.f32 %v462, %v537
        %v539 = vpop.f32.mrb[0].mxu0
        %540 = vdwg.mxu0
        %v541 = vmax.f32 %v538, 0.0
        %v542 = vrsqrt.pop %v541
        %v543 = vmul.f32 %v541, %v542
        %vm544 = vcmp.eq.f32.partialorder %v541, inf
        %v545 = vsel %vm544, %v541, %v543
        %vm546 = vcmp.eq.f32.partialorder %v541, 0.0
        %v547 = vand.u32 %v541, 2147483648
        %v548 = vsel %vm546, %v547, %v545
        %v549 = vadd.f32 %v548, 1e-05
        %v550 = vmul.f32 %v549, %v549
        %v551 = vsub.f32 0.0, %v550
        %vm552 = vcmask 130048
        %v553 = vsel %vm552, %v551, -inf
        %554 = vmax.xlane.f32.xlu0 %v553
        %v555 = vpop.xlane.xlu0 %554
        %v556 = vsub.f32 %v551, %v555
        %v557 = vmul.f32 %v556, 1.442695
        %v558 = vpow.pop %v557
        %v559 = vsel %vm552, %v558, 0.0
        %560 = vadd.xlane.f32.xlu0 %v559
        %v561 = vpop.xlane.xlu0 %560
        %v563 = vsel %vm552, %v558, 0
        %565 = vmatprep.subr.mxu0 0.0
        %566 = vmatpush1.msra.mxu0 %v455
        %567 = vmatprep.subr.mxu0 0.0
        %568 = vmatpush1.msra.mxu0 %v456
        %569 = vmatprep.subr.mxu0 0.0
        %570 = vmatpush1.msra.mxu0 0.0
        %571 = vmatprep.subr.mxu0 0.0
        %572 = vmatpush1.msra.mxu0 0.0
        %573 = vmatprep.subr.mxu0 0.0
        %574 = vmatpush1.msra.mxu0 0.0
        %575 = vmatprep.subr.mxu0 0.0
        %576 = vmatpush1.msra.mxu0 0.0
        %577 = vmatprep.subr.mxu0 0.0
        %578 = vmatpush1.msra.mxu0 0.0
        %579 = vmatprep.subr.mxu0 0.0
        %580 = vmatpush1.msra.mxu0 0.0
        %581 = vmatprep.subr.mxu0 0.0
        %582 = vmatpush1.msra.mxu0 0.0
        %583 = vmatprep.subr.mxu0 0.0
        %584 = vmatpush1.msra.mxu0 0.0
        %585 = vmatprep.subr.mxu0 0.0
        %586 = vmatpush1.msra.mxu0 0.0
        %587 = vmatprep.subr.mxu0 0.0
        %588 = vmatpush1.msra.mxu0 0.0
        %589 = vmatprep.subr.mxu0 0.0
        %590 = vmatpush1.msra.mxu0 0.0
        %591 = vmatprep.subr.mxu0 0.0
        %592 = vmatpush1.msra.mxu0 0.0
        %593 = vmatprep.subr.mxu0 0.0
        %594 = vmatpush1.msra.mxu0 0.0
        %595 = vmatprep.subr.mxu0 0.0
        %596 = vmatpush1.msra.mxu0 0.0
        %597 = vmatprep.subr.mxu0 0.0
        %598 = vmatpush1.msra.mxu0 0.0
        %599 = vmatprep.subr.mxu0 0.0
        %600 = vmatpush1.msra.mxu0 0.0
        %601 = vmatprep.subr.mxu0 0.0
        %602 = vmatpush1.msra.mxu0 0.0
        %603 = vmatprep.subr.mxu0 0.0
        %604 = vmatpush1.msra.mxu0 0.0
        %605 = vmatprep.subr.mxu0 0.0
        %606 = vmatpush1.msra.mxu0 0.0
        %607 = vmatprep.subr.mxu0 0.0
        %608 = vmatpush1.msra.mxu0 0.0
        %609 = vmatprep.subr.mxu0 0.0
        %610 = vmatpush1.msra.mxu0 0.0
        %611 = vmatprep.subr.mxu0 0.0
        %612 = vmatpush1.msra.mxu0 0.0
        %613 = vmatprep.subr.mxu0 0.0
        %614 = vmatpush1.msra.mxu0 0.0
        %615 = vmatprep.subr.mxu0 0.0
        %616 = vmatpush1.msra.mxu0 0.0
        %617 = vmatprep.subr.mxu0 0.0
        %618 = vmatpush1.msra.mxu0 0.0
        %619 = vmatprep.subr.mxu0 0.0
        %620 = vmatpush1.msra.mxu0 0.0
        %621 = vmatprep.subr.mxu0 0.0
        %622 = vmatpush1.msra.mxu0 0.0
        %623 = vmatprep.subr.mxu0 0.0
        %624 = vmatpush1.msra.mxu0 0.0
        %625 = vmatprep.subr.mxu0 0.0
        %626 = vmatpush1.msra.mxu0 0.0
        %627 = vmatprep.subr.mxu0 0.0
        %628 = vmatpush1.msra.mxu0 0.0
        %629 = vmatprep.mubr.f32.mxu0 0.0
        %630 = vmatmul.mubr.f32.gmra.mrb[0].mxu0 %v563
        %v631 = vpop.f32.mrb[0].mxu0
        %v632 = vadd.f32 0.0, %v631
        %v633 = vpop.f32.mrb[0].mxu0
        %634 = vdwg.mxu0
        %v635 = vrcp.pop %v561
        %v636 = vmul.f32 %v632, %v635
        %v637 = vld [vmem:[#allocation6] sm:$0xf]
        %v638 = vsel %vm552, %v636, 1.0
        %v639 = vld [vmem:[#allocation8] sm:$0xff]
        %v640 = vld [vmem:[#allocation8 + $0x8] sm:$0xff]
        %v641 = vld [vmem:[#allocation8 + $0x10] sm:$0xff]
        %v642 = vld [vmem:[#allocation8 + $0x18] sm:$0xff]
        %v643 = vld [vmem:[#allocation8 + $0x20] sm:$0x1]
        %v644 = vld [vmem:[#allocation8 + $0x28] sm:$0x1]
        %vm645 = vcmask 138240
        %v647 = vsel %vm645, %v638, 0
        %vm649 = vcmask 1040384
        %v651 = vsel %vm649, %v643, 0
        %v654 = vsel %vm649, %v644, 0
        %656 = vmatprep.subr.mxu0 %v640
        %657 = vmatpush1.msra.mxu0 %v639
        %658 = vmatprep.subr.mxu0 %v642
        %659 = vmatpush1.msra.mxu0 %v641
        %660 = vmatprep.subr.mxu0 %v654
        %661 = vmatpush1.msra.mxu0 %v651
        %662 = vmatprep.subr.mxu0 0.0
        %663 = vmatpush1.msra.mxu0 0.0
        %664 = vmatprep.subr.mxu0 0.0
        %665 = vmatpush1.msra.mxu0 0.0
        %666 = vmatprep.subr.mxu0 0.0
        %667 = vmatpush1.msra.mxu0 0.0
        %668 = vmatprep.subr.mxu0 0.0
        %669 = vmatpush1.msra.mxu0 0.0
        %670 = vmatprep.subr.mxu0 0.0
        %671 = vmatpush1.msra.mxu0 0.0
        %672 = vmatprep.subr.mxu0 0.0
        %673 = vmatpush1.msra.mxu0 0.0
        %674 = vmatprep.subr.mxu0 0.0
        %675 = vmatpush1.msra.mxu0 0.0
        %676 = vmatprep.subr.mxu0 0.0
        %677 = vmatpush1.msra.mxu0 0.0
        %678 = vmatprep.subr.mxu0 0.0
        %679 = vmatpush1.msra.mxu0 0.0
        %680 = vmatprep.subr.mxu0 0.0
        %681 = vmatpush1.msra.mxu0 0.0
        %682 = vmatprep.subr.mxu0 0.0
        %683 = vmatpush1.msra.mxu0 0.0
        %684 = vmatprep.subr.mxu0 0.0
        %685 = vmatpush1.msra.mxu0 0.0
        %686 = vmatprep.subr.mxu0 0.0
        %687 = vmatpush1.msra.mxu0 0.0
        %688 = vmatprep.subr.mxu0 0.0
        %689 = vmatpush1.msra.mxu0 0.0
        %690 = vmatprep.subr.mxu0 0.0
        %691 = vmatpush1.msra.mxu0 0.0
        %692 = vmatprep.subr.mxu0 0.0
        %693 = vmatpush1.msra.mxu0 0.0
        %694 = vmatprep.subr.mxu0 0.0
        %695 = vmatpush1.msra.mxu0 0.0
        %696 = vmatprep.subr.mxu0 0.0
        %697 = vmatpush1.msra.mxu0 0.0
        %698 = vmatprep.subr.mxu0 0.0
        %699 = vmatpush1.msra.mxu0 0.0
        %700 = vmatprep.subr.mxu0 0.0
        %701 = vmatpush1.msra.mxu0 0.0
        %702 = vmatprep.subr.mxu0 0.0
        %703 = vmatpush1.msra.mxu0 0.0
        %704 = vmatprep.subr.mxu0 0.0
        %705 = vmatpush1.msra.mxu0 0.0
        %706 = vmatprep.subr.mxu0 0.0
        %707 = vmatpush1.msra.mxu0 0.0
        %708 = vmatprep.subr.mxu0 0.0
        %709 = vmatpush1.msra.mxu0 0.0
        %710 = vmatprep.subr.mxu0 0.0
        %711 = vmatpush1.msra.mxu0 0.0
        %712 = vmatprep.subr.mxu0 0.0
        %713 = vmatpush1.msra.mxu0 0.0
        %714 = vmatprep.subr.mxu0 0.0
        %715 = vmatpush1.msra.mxu0 0.0
        %716 = vmatprep.subr.mxu0 0.0
        %717 = vmatpush1.msra.mxu0 0.0
        %718 = vmatprep.subr.mxu0 0.0
        %719 = vmatpush1.msra.mxu0 0.0
        %720 = vmatprep.mubr.f32.mxu0 0.0
        %721 = vmatmul.mubr.f32.gmra.mrb[0].mxu0 %v647
        %v722 = vpop.f32.mrb[0].mxu0
        %v723 = vadd.f32 0.0, %v722
        %v724 = vpop.f32.mrb[0].mxu0
        %v725 = vadd.f32 0.0, %v724
        %726 = vdwg.mxu0
        %v728 = vsel %vm467, %v637, 0
        %730 = vmatprep.subr.mxu0 0.0
        %731 = vmatpush1.msra.mxu0 %v728
        %732 = vmatprep.subr.mxu0 0.0
        %733 = vmatpush1.msra.mxu0 0.0
        %734 = vmatprep.subr.mxu0 0.0
        %735 = vmatpush1.msra.mxu0 0.0
        %736 = vmatprep.subr.mxu0 0.0
        %737 = vmatpush1.msra.mxu0 0.0
        %738 = vmatprep.subr.mxu0 0.0
        %739 = vmatpush1.msra.mxu0 0.0
        %740 = vmatprep.subr.mxu0 0.0
        %741 = vmatpush1.msra.mxu0 0.0
        %742 = vmatprep.subr.mxu0 0.0
        %743 = vmatpush1.msra.mxu0 0.0
        %744 = vmatprep.subr.mxu0 0.0
        %745 = vmatpush1.msra.mxu0 0.0
        %746 = vmatprep.subr.mxu0 0.0
        %747 = vmatpush1.msra.mxu0 0.0
        %748 = vmatprep.subr.mxu0 0.0
        %749 = vmatpush1.msra.mxu0 0.0
        %750 = vmatprep.subr.mxu0 0.0
        %751 = vmatpush1.msra.mxu0 0.0
        %752 = vmatprep.subr.mxu0 0.0
        %753 = vmatpush1.msra.mxu0 0.0
        %754 = vmatprep.subr.mxu0 0.0
        %755 = vmatpush1.msra.mxu0 0.0
        %756 = vmatprep.subr.mxu0 0.0
        %757 = vmatpush1.msra.mxu0 0.0
        %758 = vmatprep.subr.mxu0 0.0
        %759 = vmatpush1.msra.mxu0 0.0
        %760 = vmatprep.subr.mxu0 0.0
        %761 = vmatpush1.msra.mxu0 0.0
        %762 = vmatprep.subr.mxu0 0.0
        %763 = vmatpush1.msra.mxu0 0.0
        %764 = vmatprep.subr.mxu0 0.0
        %765 = vmatpush1.msra.mxu0 0.0
        %766 = vmatprep.subr.mxu0 0.0
        %767 = vmatpush1.msra.mxu0 0.0
        %768 = vmatprep.subr.mxu0 0.0
        %769 = vmatpush1.msra.mxu0 0.0
        %770 = vmatprep.subr.mxu0 0.0
        %771 = vmatpush1.msra.mxu0 0.0
        %772 = vmatprep.subr.mxu0 0.0
        %773 = vmatpush1.msra.mxu0 0.0
        %774 = vmatprep.subr.mxu0 0.0
        %775 = vmatpush1.msra.mxu0 0.0
        %776 = vmatprep.subr.mxu0 0.0
        %777 = vmatpush1.msra.mxu0 0.0
        %778 = vmatprep.subr.mxu0 0.0
        %779 = vmatpush1.msra.mxu0 0.0
        %780 = vmatprep.subr.mxu0 0.0
        %781 = vmatpush1.msra.mxu0 0.0
        %782 = vmatprep.subr.mxu0 0.0
        %783 = vmatpush1.msra.mxu0 0.0
        %784 = vmatprep.subr.mxu0 0.0
        %785 = vmatpush1.msra.mxu0 0.0
        %786 = vmatprep.subr.mxu0 0.0
        %787 = vmatpush1.msra.mxu0 0.0
        %788 = vmatprep.subr.mxu0 0.0
        %789 = vmatpush1.msra.mxu0 0.0
        %790 = vmatprep.subr.mxu0 0.0
        %791 = vmatpush1.msra.mxu0 0.0
        %792 = vmatprep.subr.mxu0 0.0
        %793 = vmatpush1.msra.mxu0 0.0
        %794 = vmatprep.mubr.f32.mxu0 0.0
        %795 = vmatmul.mubr.f32.gmra.mrb[0].mxu0 %v465
        %v796 = vpop.f32.mrb[0].mxu0
        %v797 = vadd.f32 %v723, %v796
        %v798 = vpop.f32.mrb[0].mxu0
        %799 = vdwg.mxu0
        %v800 = vmax.f32 %v797, 0.0
        %v801 = vld [vmem:[#allocation9] sm:$0xff]
        %v802 = vld [vmem:[#allocation9 + $0x8] sm:$0xff]
        %v803 = vld [vmem:[#allocation9 + $0x10] sm:$0xff]
        %v804 = vld [vmem:[#allocation9 + $0x18] sm:$0xff]
        %v805 = vld [vmem:[%s6] sm:$0x1]
        %v807 = vlaneseq
        %v808 = vshrl.u32 %v807, 7
        %v809 = vsub.s32 0, %v808
        %v810 = vrot.slane %v805, %v809
        %vm812 = vcmask 261120
        %v814 = vsel %vm812, %v800, 0
        %816 = vmatprep.subr.mxu0 0.0
        %817 = vmatpush1.msra.mxu0 %v801
        %818 = vmatprep.subr.mxu0 0.0
        %819 = vmatpush1.msra.mxu0 %v802
        %820 = vmatprep.subr.mxu0 0.0
        %821 = vmatpush1.msra.mxu0 %v803
        %822 = vmatprep.subr.mxu0 0.0
        %823 = vmatpush1.msra.mxu0 %v804
        %824 = vmatprep.subr.mxu0 0.0
        %825 = vmatpush1.msra.mxu0 0.0
        %826 = vmatprep.subr.mxu0 0.0
        %827 = vmatpush1.msra.mxu0 0.0
        %828 = vmatprep.subr.mxu0 0.0
        %829 = vmatpush1.msra.mxu0 0.0
        %830 = vmatprep.subr.mxu0 0.0
        %831 = vmatpush1.msra.mxu0 0.0
        %832 = vmatprep.subr.mxu0 0.0
        %833 = vmatpush1.msra.mxu0 0.0
        %834 = vmatprep.subr.mxu0 0.0
        %835 = vmatpush1.msra.mxu0 0.0
        %836 = vmatprep.subr.mxu0 0.0
        %837 = vmatpush1.msra.mxu0 0.0
        %838 = vmatprep.subr.mxu0 0.0
        %839 = vmatpush1.msra.mxu0 0.0
        %840 = vmatprep.subr.mxu0 0.0
        %841 = vmatpush1.msra.mxu0 0.0
        %842 = vmatprep.subr.mxu0 0.0
        %843 = vmatpush1.msra.mxu0 0.0
        %844 = vmatprep.subr.mxu0 0.0
        %845 = vmatpush1.msra.mxu0 0.0
        %846 = vmatprep.subr.mxu0 0.0
        %847 = vmatpush1.msra.mxu0 0.0
        %848 = vmatprep.subr.mxu0 0.0
        %849 = vmatpush1.msra.mxu0 0.0
        %850 = vmatprep.subr.mxu0 0.0
        %851 = vmatpush1.msra.mxu0 0.0
        %852 = vmatprep.subr.mxu0 0.0
        %853 = vmatpush1.msra.mxu0 0.0
        %854 = vmatprep.subr.mxu0 0.0
        %855 = vmatpush1.msra.mxu0 0.0
        %856 = vmatprep.subr.mxu0 0.0
        %857 = vmatpush1.msra.mxu0 0.0
        %858 = vmatprep.subr.mxu0 0.0
        %859 = vmatpush1.msra.mxu0 0.0
        %860 = vmatprep.subr.mxu0 0.0
        %861 = vmatpush1.msra.mxu0 0.0
        %862 = vmatprep.subr.mxu0 0.0
        %863 = vmatpush1.msra.mxu0 0.0
        %864 = vmatprep.subr.mxu0 0.0
        %865 = vmatpush1.msra.mxu0 0.0
        %866 = vmatprep.subr.mxu0 0.0
        %867 = vmatpush1.msra.mxu0 0.0
        %868 = vmatprep.subr.mxu0 0.0
        %869 = vmatpush1.msra.mxu0 0.0
        %870 = vmatprep.subr.mxu0 0.0
        %871 = vmatpush1.msra.mxu0 0.0
        %872 = vmatprep.subr.mxu0 0.0
        %873 = vmatpush1.msra.mxu0 0.0
        %874 = vmatprep.subr.mxu0 0.0
        %875 = vmatpush1.msra.mxu0 0.0
        %876 = vmatprep.subr.mxu0 0.0
        %877 = vmatpush1.msra.mxu0 0.0
        %878 = vmatprep.subr.mxu0 0.0
        %879 = vmatpush1.msra.mxu0 0.0
        %880 = vmatprep.mubr.f32.mxu0 0.0
        %881 = vmatmul.mubr.f32.gmra.mrb[0].mxu0 %v814
        %v882 = vpop.f32.mrb[0].mxu0
        %v883 = vadd.f32 %v810, %v882
        %v884 = vpop.f32.mrb[0].mxu0
        %885 = vdwg.mxu0
        %v886 = vmax.f32 %v883, 0.0
        %s887 = scalar_lea.vmem [#allocation9], 32
        %v888 = vld [vmem:[%s887] sm:$0xff]
        %v889 = vld [vmem:[%s887 + $0x8] sm:$0xff]
        %v890 = vld [vmem:[%s887 + $0x10] sm:$0xff]
        %v891 = vld [vmem:[%s887 + $0x18] sm:$0xff]
        %s892 = scalar_lea.vmem %s6, 1
        %v893 = vld [vmem:[%s892] sm:$0x1]
        %v895 = vlaneseq
        %v896 = vshrl.u32 %v895, 7
        %v897 = vsub.s32 0, %v896
        %v898 = vrot.slane %v893, %v897
        %v901 = vsel %vm812, %v886, 0
        %903 = vmatprep.subr.mxu0 0.0
        %904 = vmatpush1.msra.mxu0 %v888
        %905 = vmatprep.subr.mxu0 0.0
        %906 = vmatpush1.msra.mxu0 %v889
        %907 = vmatprep.subr.mxu0 0.0
        %908 = vmatpush1.msra.mxu0 %v890
        %909 = vmatprep.subr.mxu0 0.0
        %910 = vmatpush1.msra.mxu0 %v891
        %911 = vmatprep.subr.mxu0 0.0
        %912 = vmatpush1.msra.mxu0 0.0
        %913 = vmatprep.subr.mxu0 0.0
        %914 = vmatpush1.msra.mxu0 0.0
        %915 = vmatprep.subr.mxu0 0.0
        %916 = vmatpush1.msra.mxu0 0.0
        %917 = vmatprep.subr.mxu0 0.0
        %918 = vmatpush1.msra.mxu0 0.0
        %919 = vmatprep.subr.mxu0 0.0
        %920 = vmatpush1.msra.mxu0 0.0
        %921 = vmatprep.subr.mxu0 0.0
        %922 = vmatpush1.msra.mxu0 0.0
        %923 = vmatprep.subr.mxu0 0.0
        %924 = vmatpush1.msra.mxu0 0.0
        %925 = vmatprep.subr.mxu0 0.0
        %926 = vmatpush1.msra.mxu0 0.0
        %927 = vmatprep.subr.mxu0 0.0
        %928 = vmatpush1.msra.mxu0 0.0
        %929 = vmatprep.subr.mxu0 0.0
        %930 = vmatpush1.msra.mxu0 0.0
        %931 = vmatprep.subr.mxu0 0.0
        %932 = vmatpush1.msra.mxu0 0.0
        %933 = vmatprep.subr.mxu0 0.0
        %934 = vmatpush1.msra.mxu0 0.0
        %935 = vmatprep.subr.mxu0 0.0
        %936 = vmatpush1.msra.mxu0 0.0
        %937 = vmatprep.subr.mxu0 0.0
        %938 = vmatpush1.msra.mxu0 0.0
        %939 = vmatprep.subr.mxu0 0.0
        %940 = vmatpush1.msra.mxu0 0.0
        %941 = vmatprep.subr.mxu0 0.0
        %942 = vmatpush1.msra.mxu0 0.0
        %943 = vmatprep.subr.mxu0 0.0
        %944 = vmatpush1.msra.mxu0 0.0
        %945 = vmatprep.subr.mxu0 0.0
        %946 = vmatpush1.msra.mxu0 0.0
        %947 = vmatprep.subr.mxu0 0.0
        %948 = vmatpush1.msra.mxu0 0.0
        %949 = vmatprep.subr.mxu0 0.0
        %950 = vmatpush1.msra.mxu0 0.0
        %951 = vmatprep.subr.mxu0 0.0
        %952 = vmatpush1.msra.mxu0 0.0
        %953 = vmatprep.subr.mxu0 0.0
        %954 = vmatpush1.msra.mxu0 0.0
        %955 = vmatprep.subr.mxu0 0.0
        %956 = vmatpush1.msra.mxu0 0.0
        %957 = vmatprep.subr.mxu0 0.0
        %958 = vmatpush1.msra.mxu0 0.0
        %959 = vmatprep.subr.mxu0 0.0
        %960 = vmatpush1.msra.mxu0 0.0
        %961 = vmatprep.subr.mxu0 0.0
        %962 = vmatpush1.msra.mxu0 0.0
        %963 = vmatprep.subr.mxu0 0.0
        %964 = vmatpush1.msra.mxu0 0.0
        %965 = vmatprep.subr.mxu0 0.0
        %966 = vmatpush1.msra.mxu0 0.0
        %967 = vmatprep.mubr.f32.mxu0 0.0
        %968 = vmatmul.mubr.f32.gmra.mrb[0].mxu0 %v901
        %v969 = vpop.f32.mrb[0].mxu0
        %v970 = vadd.f32 %v898, %v969
        %v971 = vpop.f32.mrb[0].mxu0
        %972 = vdwg.mxu0
        %v973 = vadd.f32 %v797, %v970
        %975 = vrot.lane.b32.xlu0 %v723, 96
        %v976 = vpop.permute.xlu0 %975
        %v978 = vadd.f32 %v973, %v976
        %v979 = vmax.f32 %v978, 0.0
        %s980 = scalar_lea.vmem [#allocation9], 64
        %v981 = vld [vmem:[%s980] sm:$0xff]
        %v982 = vld [vmem:[%s980 + $0x8] sm:$0xff]
        %v983 = vld [vmem:[%s980 + $0x10] sm:$0xff]
        %v984 = vld [vmem:[%s980 + $0x18] sm:$0xff]
        %s985 = scalar_lea.vmem %s6, 2
        %v986 = vld [vmem:[%s985] sm:$0x1]
        %v988 = vlaneseq
        %v989 = vshrl.u32 %v988, 7
        %v990 = vsub.s32 0, %v989
        %v991 = vrot.slane %v986, %v990
        %v994 = vsel %vm812, %v979, 0
        %996 = vmatprep.subr.mxu0 0.0
        %997 = vmatpush1.msra.mxu0 %v981
        %998 = vmatprep.subr.mxu0 0.0
        %999 = vmatpush1.msra.mxu0 %v982
        %1000 = vmatprep.subr.mxu0 0.0
        %1001 = vmatpush1.msra.mxu0 %v983
        %1002 = vmatprep.subr.mxu0 0.0
        %1003 = vmatpush1.msra.mxu0 %v984
        %1004 = vmatprep.subr.mxu0 0.0
        %1005 = vmatpush1.msra.mxu0 0.0
        %1006 = vmatprep.subr.mxu0 0.0
        %1007 = vmatpush1.msra.mxu0 0.0
        %1008 = vmatprep.subr.mxu0 0.0
        %1009 = vmatpush1.msra.mxu0 0.0
        %1010 = vmatprep.subr.mxu0 0.0
        %1011 = vmatpush1.msra.mxu0 0.0
        %1012 = vmatprep.subr.mxu0 0.0
        %1013 = vmatpush1.msra.mxu0 0.0
        %1014 = vmatprep.subr.mxu0 0.0
        %1015 = vmatpush1.msra.mxu0 0.0
        %1016 = vmatprep.subr.mxu0 0.0
        %1017 = vmatpush1.msra.mxu0 0.0
        %1018 = vmatprep.subr.mxu0 0.0
        %1019 = vmatpush1.msra.mxu0 0.0
        %1020 = vmatprep.subr.mxu0 0.0
        %1021 = vmatpush1.msra.mxu0 0.0
        %1022 = vmatprep.subr.mxu0 0.0
        %1023 = vmatpush1.msra.mxu0 0.0
        %1024 = vmatprep.subr.mxu0 0.0
        %1025 = vmatpush1.msra.mxu0 0.0
        %1026 = vmatprep.subr.mxu0 0.0
        %1027 = vmatpush1.msra.mxu0 0.0
        %1028 = vmatprep.subr.mxu0 0.0
        %1029 = vmatpush1.msra.mxu0 0.0
        %1030 = vmatprep.subr.mxu0 0.0
        %1031 = vmatpush1.msra.mxu0 0.0
        %1032 = vmatprep.subr.mxu0 0.0
        %1033 = vmatpush1.msra.mxu0 0.0
        %1034 = vmatprep.subr.mxu0 0.0
        %1035 = vmatpush1.msra.mxu0 0.0
        %1036 = vmatprep.subr.mxu0 0.0
        %1037 = vmatpush1.msra.mxu0 0.0
        %1038 = vmatprep.subr.mxu0 0.0
        %1039 = vmatpush1.msra.mxu0 0.0
        %1040 = vmatprep.subr.mxu0 0.0
        %1041 = vmatpush1.msra.mxu0 0.0
        %1042 = vmatprep.subr.mxu0 0.0
        %1043 = vmatpush1.msra.mxu0 0.0
        %1044 = vmatprep.subr.mxu0 0.0
        %1045 = vmatpush1.msra.mxu0 0.0
        %1046 = vmatprep.subr.mxu0 0.0
        %1047 = vmatpush1.msra.mxu0 0.0
        %1048 = vmatprep.subr.mxu0 0.0
        %1049 = vmatpush1.msra.mxu0 0.0
        %1050 = vmatprep.subr.mxu0 0.0
        %1051 = vmatpush1.msra.mxu0 0.0
        %1052 = vmatprep.subr.mxu0 0.0
        %1053 = vmatpush1.msra.mxu0 0.0
        %1054 = vmatprep.subr.mxu0 0.0
        %1055 = vmatpush1.msra.mxu0 0.0
        %1056 = vmatprep.subr.mxu0 0.0
        %1057 = vmatpush1.msra.mxu0 0.0
        %1058 = vmatprep.subr.mxu0 0.0
        %1059 = vmatpush1.msra.mxu0 0.0
        %1060 = vmatprep.mubr.f32.mxu0 0.0
        %1061 = vmatmul.mubr.f32.gmra.mrb[0].mxu0 %v994
        %v1062 = vpop.f32.mrb[0].mxu0
        %v1063 = vadd.f32 %v991, %v1062
        %v1064 = vpop.f32.mrb[0].mxu0
        %1065 = vdwg.mxu0
        %v1066 = vmax.f32 %v1063, 0.0
        %s1067 = scalar_lea.vmem [#allocation9], 96
        %v1068 = vld [vmem:[%s1067] sm:$0xff]
        %v1069 = vld [vmem:[%s1067 + $0x8] sm:$0xff]
        %v1070 = vld [vmem:[%s1067 + $0x10] sm:$0xff]
        %v1071 = vld [vmem:[%s1067 + $0x18] sm:$0xff]
        %s1072 = scalar_lea.vmem %s6, 3
        %v1073 = vld [vmem:[%s1072] sm:$0x1]
        %v1075 = vlaneseq
        %v1076 = vshrl.u32 %v1075, 7
        %v1077 = vsub.s32 0, %v1076
        %v1078 = vrot.slane %v1073, %v1077
        %v1081 = vsel %vm812, %v1066, 0
        %1083 = vmatprep.subr.mxu0 0.0
        %1084 = vmatpush1.msra.mxu0 %v1068
        %1085 = vmatprep.subr.mxu0 0.0
        %1086 = vmatpush1.msra.mxu0 %v1069
        %1087 = vmatprep.subr.mxu0 0.0
        %1088 = vmatpush1.msra.mxu0 %v1070
        %1089 = vmatprep.subr.mxu0 0.0
        %1090 = vmatpush1.msra.mxu0 %v1071
        %1091 = vmatprep.subr.mxu0 0.0
        %1092 = vmatpush1.msra.mxu0 0.0
        %1093 = vmatprep.subr.mxu0 0.0
        %1094 = vmatpush1.msra.mxu0 0.0
        %1095 = vmatprep.subr.mxu0 0.0
        %1096 = vmatpush1.msra.mxu0 0.0
        %1097 = vmatprep.subr.mxu0 0.0
        %1098 = vmatpush1.msra.mxu0 0.0
        %1099 = vmatprep.subr.mxu0 0.0
        %1100 = vmatpush1.msra.mxu0 0.0
        %1101 = vmatprep.subr.mxu0 0.0
        %1102 = vmatpush1.msra.mxu0 0.0
        %1103 = vmatprep.subr.mxu0 0.0
        %1104 = vmatpush1.msra.mxu0 0.0
        %1105 = vmatprep.subr.mxu0 0.0
        %1106 = vmatpush1.msra.mxu0 0.0
        %1107 = vmatprep.subr.mxu0 0.0
        %1108 = vmatpush1.msra.mxu0 0.0
        %1109 = vmatprep.subr.mxu0 0.0
        %1110 = vmatpush1.msra.mxu0 0.0
        %1111 = vmatprep.subr.mxu0 0.0
        %1112 = vmatpush1.msra.mxu0 0.0
        %1113 = vmatprep.subr.mxu0 0.0
        %1114 = vmatpush1.msra.mxu0 0.0
        %1115 = vmatprep.subr.mxu0 0.0
        %1116 = vmatpush1.msra.mxu0 0.0
        %1117 = vmatprep.subr.mxu0 0.0
        %1118 = vmatpush1.msra.mxu0 0.0
        %1119 = vmatprep.subr.mxu0 0.0
        %1120 = vmatpush1.msra.mxu0 0.0
        %1121 = vmatprep.subr.mxu0 0.0
        %1122 = vmatpush1.msra.mxu0 0.0
        %1123 = vmatprep.subr.mxu0 0.0
        %1124 = vmatpush1.msra.mxu0 0.0
        %1125 = vmatprep.subr.mxu0 0.0
        %1126 = vmatpush1.msra.mxu0 0.0
        %1127 = vmatprep.subr.mxu0 0.0
        %1128 = vmatpush1.msra.mxu0 0.0
        %1129 = vmatprep.subr.mxu0 0.0
        %1130 = vmatpush1.msra.mxu0 0.0
        %1131 = vmatprep.subr.mxu0 0.0
        %1132 = vmatpush1.msra.mxu0 0.0
        %1133 = vmatprep.subr.mxu0 0.0
        %1134 = vmatpush1.msra.mxu0 0.0
        %1135 = vmatprep.subr.mxu0 0.0
        %1136 = vmatpush1.msra.mxu0 0.0
        %1137 = vmatprep.subr.mxu0 0.0
        %1138 = vmatpush1.msra.mxu0 0.0
        %1139 = vmatprep.subr.mxu0 0.0
        %1140 = vmatpush1.msra.mxu0 0.0
        %1141 = vmatprep.subr.mxu0 0.0
        %1142 = vmatpush1.msra.mxu0 0.0
        %1143 = vmatprep.subr.mxu0 0.0
        %1144 = vmatpush1.msra.mxu0 0.0
        %1145 = vmatprep.subr.mxu0 0.0
        %1146 = vmatpush1.msra.mxu0 0.0
        %1147 = vmatprep.mubr.f32.mxu0 0.0
        %1148 = vmatmul.mubr.f32.gmra.mrb[0].mxu0 %v1081
        %v1149 = vpop.f32.mrb[0].mxu0
        %v1150 = vadd.f32 %v1078, %v1149
        %v1151 = vpop.f32.mrb[0].mxu0
        %1152 = vdwg.mxu0
        %v1153 = vadd.f32 %v978, %v1150
        %1154 = vrot.lane.b32.xlu0 %v723, 64
        %v1155 = vpop.permute.xlu0 %1154
        %v1157 = vadd.f32 %v1153, %v1155
        %v1158 = vmax.f32 %v1157, 0.0
        %s1159 = scalar_lea.vmem [#allocation9], 128
        %v1160 = vld [vmem:[%s1159] sm:$0xff]
        %v1161 = vld [vmem:[%s1159 + $0x8] sm:$0xff]
        %v1162 = vld [vmem:[%s1159 + $0x10] sm:$0xff]
        %v1163 = vld [vmem:[%s1159 + $0x18] sm:$0xff]
        %s1164 = scalar_lea.vmem %s6, 4
        %v1165 = vld [vmem:[%s1164] sm:$0x1]
        %v1167 = vlaneseq
        %v1168 = vshrl.u32 %v1167, 7
        %v1169 = vsub.s32 0, %v1168
        %v1170 = vrot.slane %v1165, %v1169
        %v1173 = vsel %vm812, %v1158, 0
        %1175 = vmatprep.subr.mxu0 0.0
        %1176 = vmatpush1.msra.mxu0 %v1160
        %1177 = vmatprep.subr.mxu0 0.0
        %1178 = vmatpush1.msra.mxu0 %v1161
        %1179 = vmatprep.subr.mxu0 0.0
        %1180 = vmatpush1.msra.mxu0 %v1162
        %1181 = vmatprep.subr.mxu0 0.0
        %1182 = vmatpush1.msra.mxu0 %v1163
        %1183 = vmatprep.subr.mxu0 0.0
        %1184 = vmatpush1.msra.mxu0 0.0
        %1185 = vmatprep.subr.mxu0 0.0
        %1186 = vmatpush1.msra.mxu0 0.0
        %1187 = vmatprep.subr.mxu0 0.0
        %1188 = vmatpush1.msra.mxu0 0.0
        %1189 = vmatprep.subr.mxu0 0.0
        %1190 = vmatpush1.msra.mxu0 0.0
        %1191 = vmatprep.subr.mxu0 0.0
        %1192 = vmatpush1.msra.mxu0 0.0
        %1193 = vmatprep.subr.mxu0 0.0
        %1194 = vmatpush1.msra.mxu0 0.0
        %1195 = vmatprep.subr.mxu0 0.0
        %1196 = vmatpush1.msra.mxu0 0.0
        %1197 = vmatprep.subr.mxu0 0.0
        %1198 = vmatpush1.msra.mxu0 0.0
        %1199 = vmatprep.subr.mxu0 0.0
        %1200 = vmatpush1.msra.mxu0 0.0
        %1201 = vmatprep.subr.mxu0 0.0
        %1202 = vmatpush1.msra.mxu0 0.0
        %1203 = vmatprep.subr.mxu0 0.0
        %1204 = vmatpush1.msra.mxu0 0.0
        %1205 = vmatprep.subr.mxu0 0.0
        %1206 = vmatpush1.msra.mxu0 0.0
        %1207 = vmatprep.subr.mxu0 0.0
        %1208 = vmatpush1.msra.mxu0 0.0
        %1209 = vmatprep.subr.mxu0 0.0
        %1210 = vmatpush1.msra.mxu0 0.0
        %1211 = vmatprep.subr.mxu0 0.0
        %1212 = vmatpush1.msra.mxu0 0.0
        %1213 = vmatprep.subr.mxu0 0.0
        %1214 = vmatpush1.msra.mxu0 0.0
        %1215 = vmatprep.subr.mxu0 0.0
        %1216 = vmatpush1.msra.mxu0 0.0
        %1217 = vmatprep.subr.mxu0 0.0
        %1218 = vmatpush1.msra.mxu0 0.0
        %1219 = vmatprep.subr.mxu0 0.0
        %1220 = vmatpush1.msra.mxu0 0.0
        %1221 = vmatprep.subr.mxu0 0.0
        %1222 = vmatpush1.msra.mxu0 0.0
        %1223 = vmatprep.subr.mxu0 0.0
        %1224 = vmatpush1.msra.mxu0 0.0
        %1225 = vmatprep.subr.mxu0 0.0
        %1226 = vmatpush1.msra.mxu0 0.0
        %1227 = vmatprep.subr.mxu0 0.0
        %1228 = vmatpush1.msra.mxu0 0.0
        %1229 = vmatprep.subr.mxu0 0.0
        %1230 = vmatpush1.msra.mxu0 0.0
        %1231 = vmatprep.subr.mxu0 0.0
        %1232 = vmatpush1.msra.mxu0 0.0
        %1233 = vmatprep.subr.mxu0 0.0
        %1234 = vmatpush1.msra.mxu0 0.0
        %1235 = vmatprep.subr.mxu0 0.0
        %1236 = vmatpush1.msra.mxu0 0.0
        %1237 = vmatprep.subr.mxu0 0.0
        %1238 = vmatpush1.msra.mxu0 0.0
        %1239 = vmatprep.mubr.f32.mxu0 0.0
        %1240 = vmatmul.mubr.f32.gmra.mrb[0].mxu0 %v1173
        %v1241 = vpop.f32.mrb[0].mxu0
        %v1242 = vadd.f32 %v1170, %v1241
        %v1243 = vpop.f32.mrb[0].mxu0
        %1244 = vdwg.mxu0
        %v1245 = vmax.f32 %v1242, 0.0
        %s1246 = scalar_lea.vmem [#allocation9], 160
        %v1247 = vld [vmem:[%s1246] sm:$0xff]
        %v1248 = vld [vmem:[%s1246 + $0x8] sm:$0xff]
        %v1249 = vld [vmem:[%s1246 + $0x10] sm:$0xff]
        %v1250 = vld [vmem:[%s1246 + $0x18] sm:$0xff]
        %s1251 = scalar_lea.vmem %s6, 5
        %v1252 = vld [vmem:[%s1251] sm:$0x1]
        %v1254 = vlaneseq
        %v1255 = vshrl.u32 %v1254, 7
        %v1256 = vsub.s32 0, %v1255
        %v1257 = vrot.slane %v1252, %v1256
        %v1260 = vsel %vm812, %v1245, 0
        %1262 = vmatprep.subr.mxu0 0.0
        %1263 = vmatpush1.msra.mxu0 %v1247
        %1264 = vmatprep.subr.mxu0 0.0
        %1265 = vmatpush1.msra.mxu0 %v1248
        %1266 = vmatprep.subr.mxu0 0.0
        %1267 = vmatpush1.msra.mxu0 %v1249
        %1268 = vmatprep.subr.mxu0 0.0
        %1269 = vmatpush1.msra.mxu0 %v1250
        %1270 = vmatprep.subr.mxu0 0.0
        %1271 = vmatpush1.msra.mxu0 0.0
        %1272 = vmatprep.subr.mxu0 0.0
        %1273 = vmatpush1.msra.mxu0 0.0
        %1274 = vmatprep.subr.mxu0 0.0
        %1275 = vmatpush1.msra.mxu0 0.0
        %1276 = vmatprep.subr.mxu0 0.0
        %1277 = vmatpush1.msra.mxu0 0.0
        %1278 = vmatprep.subr.mxu0 0.0
        %1279 = vmatpush1.msra.mxu0 0.0
        %1280 = vmatprep.subr.mxu0 0.0
        %1281 = vmatpush1.msra.mxu0 0.0
        %1282 = vmatprep.subr.mxu0 0.0
        %1283 = vmatpush1.msra.mxu0 0.0
        %1284 = vmatprep.subr.mxu0 0.0
        %1285 = vmatpush1.msra.mxu0 0.0
        %1286 = vmatprep.subr.mxu0 0.0
        %1287 = vmatpush1.msra.mxu0 0.0
        %1288 = vmatprep.subr.mxu0 0.0
        %1289 = vmatpush1.msra.mxu0 0.0
        %1290 = vmatprep.subr.mxu0 0.0
        %1291 = vmatpush1.msra.mxu0 0.0
        %1292 = vmatprep.subr.mxu0 0.0
        %1293 = vmatpush1.msra.mxu0 0.0
        %1294 = vmatprep.subr.mxu0 0.0
        %1295 = vmatpush1.msra.mxu0 0.0
        %1296 = vmatprep.subr.mxu0 0.0
        %1297 = vmatpush1.msra.mxu0 0.0
        %1298 = vmatprep.subr.mxu0 0.0
        %1299 = vmatpush1.msra.mxu0 0.0
        %1300 = vmatprep.subr.mxu0 0.0
        %1301 = vmatpush1.msra.mxu0 0.0
        %1302 = vmatprep.subr.mxu0 0.0
        %1303 = vmatpush1.msra.mxu0 0.0
        %1304 = vmatprep.subr.mxu0 0.0
        %1305 = vmatpush1.msra.mxu0 0.0
        %1306 = vmatprep.subr.mxu0 0.0
        %1307 = vmatpush1.msra.mxu0 0.0
        %1308 = vmatprep.subr.mxu0 0.0
        %1309 = vmatpush1.msra.mxu0 0.0
        %1310 = vmatprep.subr.mxu0 0.0
        %1311 = vmatpush1.msra.mxu0 0.0
        %1312 = vmatprep.subr.mxu0 0.0
        %1313 = vmatpush1.msra.mxu0 0.0
        %1314 = vmatprep.subr.mxu0 0.0
        %1315 = vmatpush1.msra.mxu0 0.0
        %1316 = vmatprep.subr.mxu0 0.0
        %1317 = vmatpush1.msra.mxu0 0.0
        %1318 = vmatprep.subr.mxu0 0.0
        %1319 = vmatpush1.msra.mxu0 0.0
        %1320 = vmatprep.subr.mxu0 0.0
        %1321 = vmatpush1.msra.mxu0 0.0
        %1322 = vmatprep.subr.mxu0 0.0
        %1323 = vmatpush1.msra.mxu0 0.0
        %1324 = vmatprep.subr.mxu0 0.0
        %1325 = vmatpush1.msra.mxu0 0.0
        %1326 = vmatprep.mubr.f32.mxu0 0.0
        %1327 = vmatmul.mubr.f32.gmra.mrb[0].mxu0 %v1260
        %v1328 = vpop.f32.mrb[0].mxu0
        %v1329 = vadd.f32 %v1257, %v1328
        %v1330 = vpop.f32.mrb[0].mxu0
        %1331 = vdwg.mxu0
        %v1332 = vadd.f32 %v1157, %v1329
        %1333 = vrot.lane.b32.xlu0 %v723, 32
        %v1334 = vpop.permute.xlu0 %1333
        %v1336 = vadd.f32 %v1332, %v1334
        %v1337 = vmax.f32 %v1336, 0.0
        %s1338 = scalar_lea.vmem [#allocation9], 192
        %v1339 = vld [vmem:[%s1338] sm:$0xff]
        %v1340 = vld [vmem:[%s1338 + $0x8] sm:$0xff]
        %v1341 = vld [vmem:[%s1338 + $0x10] sm:$0xff]
        %v1342 = vld [vmem:[%s1338 + $0x18] sm:$0xff]
        %s1343 = scalar_lea.vmem %s6, 6
        %v1344 = vld [vmem:[%s1343] sm:$0x1]
        %v1346 = vlaneseq
        %v1347 = vshrl.u32 %v1346, 7
        %v1348 = vsub.s32 0, %v1347
        %v1349 = vrot.slane %v1344, %v1348
        %v1352 = vsel %vm812, %v1337, 0
        %1354 = vmatprep.subr.mxu0 0.0
        %1355 = vmatpush1.msra.mxu0 %v1339
        %1356 = vmatprep.subr.mxu0 0.0
        %1357 = vmatpush1.msra.mxu0 %v1340
        %1358 = vmatprep.subr.mxu0 0.0
        %1359 = vmatpush1.msra.mxu0 %v1341
        %1360 = vmatprep.subr.mxu0 0.0
        %1361 = vmatpush1.msra.mxu0 %v1342
        %1362 = vmatprep.subr.mxu0 0.0
        %1363 = vmatpush1.msra.mxu0 0.0
        %1364 = vmatprep.subr.mxu0 0.0
        %1365 = vmatpush1.msra.mxu0 0.0
        %1366 = vmatprep.subr.mxu0 0.0
        %1367 = vmatpush1.msra.mxu0 0.0
        %1368 = vmatprep.subr.mxu0 0.0
        %1369 = vmatpush1.msra.mxu0 0.0
        %1370 = vmatprep.subr.mxu0 0.0
        %1371 = vmatpush1.msra.mxu0 0.0
        %1372 = vmatprep.subr.mxu0 0.0
        %1373 = vmatpush1.msra.mxu0 0.0
        %1374 = vmatprep.subr.mxu0 0.0
        %1375 = vmatpush1.msra.mxu0 0.0
        %1376 = vmatprep.subr.mxu0 0.0
        %1377 = vmatpush1.msra.mxu0 0.0
        %1378 = vmatprep.subr.mxu0 0.0
        %1379 = vmatpush1.msra.mxu0 0.0
        %1380 = vmatprep.subr.mxu0 0.0
        %1381 = vmatpush1.msra.mxu0 0.0
        %1382 = vmatprep.subr.mxu0 0.0
        %1383 = vmatpush1.msra.mxu0 0.0
        %1384 = vmatprep.subr.mxu0 0.0
        %1385 = vmatpush1.msra.mxu0 0.0
        %1386 = vmatprep.subr.mxu0 0.0
        %1387 = vmatpush1.msra.mxu0 0.0
        %1388 = vmatprep.subr.mxu0 0.0
        %1389 = vmatpush1.msra.mxu0 0.0
        %1390 = vmatprep.subr.mxu0 0.0
        %1391 = vmatpush1.msra.mxu0 0.0
        %1392 = vmatprep.subr.mxu0 0.0
        %1393 = vmatpush1.msra.mxu0 0.0
        %1394 = vmatprep.subr.mxu0 0.0
        %1395 = vmatpush1.msra.mxu0 0.0
        %1396 = vmatprep.subr.mxu0 0.0
        %1397 = vmatpush1.msra.mxu0 0.0
        %1398 = vmatprep.subr.mxu0 0.0
        %1399 = vmatpush1.msra.mxu0 0.0
        %1400 = vmatprep.subr.mxu0 0.0
        %1401 = vmatpush1.msra.mxu0 0.0
        %1402 = vmatprep.subr.mxu0 0.0
        %1403 = vmatpush1.msra.mxu0 0.0
        %1404 = vmatprep.subr.mxu0 0.0
        %1405 = vmatpush1.msra.mxu0 0.0
        %1406 = vmatprep.subr.mxu0 0.0
        %1407 = vmatpush1.msra.mxu0 0.0
        %1408 = vmatprep.subr.mxu0 0.0
        %1409 = vmatpush1.msra.mxu0 0.0
        %1410 = vmatprep.subr.mxu0 0.0
        %1411 = vmatpush1.msra.mxu0 0.0
        %1412 = vmatprep.subr.mxu0 0.0
        %1413 = vmatpush1.msra.mxu0 0.0
        %1414 = vmatprep.subr.mxu0 0.0
        %1415 = vmatpush1.msra.mxu0 0.0
        %1416 = vmatprep.subr.mxu0 0.0
        %1417 = vmatpush1.msra.mxu0 0.0
        %1418 = vmatprep.mubr.f32.mxu0 0.0
        %1419 = vmatmul.mubr.f32.gmra.mrb[0].mxu0 %v1352
        %v1420 = vpop.f32.mrb[0].mxu0
        %v1421 = vadd.f32 %v1349, %v1420
        %v1422 = vpop.f32.mrb[0].mxu0
        %1423 = vdwg.mxu0
        %v1424 = vmax.f32 %v1421, 0.0
        %s1425 = scalar_lea.vmem [#allocation9], 224
        %v1426 = vld [vmem:[%s1425] sm:$0xff]
        %v1427 = vld [vmem:[%s1425 + $0x8] sm:$0xff]
        %v1428 = vld [vmem:[%s1425 + $0x10] sm:$0xff]
        %v1429 = vld [vmem:[%s1425 + $0x18] sm:$0xff]
        %s1430 = scalar_lea.vmem %s6, 7
        %v1431 = vld [vmem:[%s1430] sm:$0x1]
        %v1433 = vlaneseq
        %v1434 = vshrl.u32 %v1433, 7
        %v1435 = vsub.s32 0, %v1434
        %v1436 = vrot.slane %v1431, %v1435
        %v1439 = vsel %vm812, %v1424, 0
        %1441 = vmatprep.subr.mxu0 0.0
        %1442 = vmatpush1.msra.mxu0 %v1426
        %1443 = vmatprep.subr.mxu0 0.0
        %1444 = vmatpush1.msra.mxu0 %v1427
        %1445 = vmatprep.subr.mxu0 0.0
        %1446 = vmatpush1.msra.mxu0 %v1428
        %1447 = vmatprep.subr.mxu0 0.0
        %1448 = vmatpush1.msra.mxu0 %v1429
        %1449 = vmatprep.subr.mxu0 0.0
        %1450 = vmatpush1.msra.mxu0 0.0
        %1451 = vmatprep.subr.mxu0 0.0
        %1452 = vmatpush1.msra.mxu0 0.0
        %1453 = vmatprep.subr.mxu0 0.0
        %1454 = vmatpush1.msra.mxu0 0.0
        %1455 = vmatprep.subr.mxu0 0.0
        %1456 = vmatpush1.msra.mxu0 0.0
        %1457 = vmatprep.subr.mxu0 0.0
        %1458 = vmatpush1.msra.mxu0 0.0
        %1459 = vmatprep.subr.mxu0 0.0
        %1460 = vmatpush1.msra.mxu0 0.0
        %1461 = vmatprep.subr.mxu0 0.0
        %1462 = vmatpush1.msra.mxu0 0.0
        %1463 = vmatprep.subr.mxu0 0.0
        %1464 = vmatpush1.msra.mxu0 0.0
        %1465 = vmatprep.subr.mxu0 0.0
        %1466 = vmatpush1.msra.mxu0 0.0
        %1467 = vmatprep.subr.mxu0 0.0
        %1468 = vmatpush1.msra.mxu0 0.0
        %1469 = vmatprep.subr.mxu0 0.0
        %1470 = vmatpush1.msra.mxu0 0.0
        %1471 = vmatprep.subr.mxu0 0.0
        %1472 = vmatpush1.msra.mxu0 0.0
        %1473 = vmatprep.subr.mxu0 0.0
        %1474 = vmatpush1.msra.mxu0 0.0
        %1475 = vmatprep.subr.mxu0 0.0
        %1476 = vmatpush1.msra.mxu0 0.0
        %1477 = vmatprep.subr.mxu0 0.0
        %1478 = vmatpush1.msra.mxu0 0.0
        %1479 = vmatprep.subr.mxu0 0.0
        %1480 = vmatpush1.msra.mxu0 0.0
        %1481 = vmatprep.subr.mxu0 0.0
        %1482 = vmatpush1.msra.mxu0 0.0
        %1483 = vmatprep.subr.mxu0 0.0
        %1484 = vmatpush1.msra.mxu0 0.0
        %1485 = vmatprep.subr.mxu0 0.0
        %1486 = vmatpush1.msra.mxu0 0.0
        %1487 = vmatprep.subr.mxu0 0.0
        %1488 = vmatpush1.msra.mxu0 0.0
        %1489 = vmatprep.subr.mxu0 0.0
        %1490 = vmatpush1.msra.mxu0 0.0
        %1491 = vmatprep.subr.mxu0 0.0
        %1492 = vmatpush1.msra.mxu0 0.0
        %1493 = vmatprep.subr.mxu0 0.0
        %1494 = vmatpush1.msra.mxu0 0.0
        %1495 = vmatprep.subr.mxu0 0.0
        %1496 = vmatpush1.msra.mxu0 0.0
        %1497 = vmatprep.subr.mxu0 0.0
        %1498 = vmatpush1.msra.mxu0 0.0
        %1499 = vmatprep.subr.mxu0 0.0
        %1500 = vmatpush1.msra.mxu0 0.0
        %1501 = vmatprep.subr.mxu0 0.0
        %1502 = vmatpush1.msra.mxu0 0.0
        %1503 = vmatprep.subr.mxu0 0.0
        %1504 = vmatpush1.msra.mxu0 0.0
        %1505 = vmatprep.mubr.f32.mxu0 0.0
        %1506 = vmatmul.mubr.f32.gmra.mrb[0].mxu0 %v1439
        %v1507 = vpop.f32.mrb[0].mxu0
        %v1508 = vadd.f32 %v1436, %v1507
        %v1509 = vpop.f32.mrb[0].mxu0
        %1510 = vdwg.mxu0
        %v1511 = vadd.f32 %v1336, %v1508
        %v1512 = vadd.f32 %v1511, %v725
        %v1513 = vmax.f32 %v1512, 0.0
        %s1514 = scalar_lea.vmem [#allocation9], 256
        %v1515 = vld [vmem:[%s1514] sm:$0xff]
        %v1516 = vld [vmem:[%s1514 + $0x8] sm:$0xff]
        %v1517 = vld [vmem:[%s1514 + $0x10] sm:$0xff]
        %v1518 = vld [vmem:[%s1514 + $0x18] sm:$0xff]
        %s1519 = scalar_lea.vmem %s6, 8
        %v1520 = vld [vmem:[%s1519] sm:$0x1]
        %v1522 = vlaneseq
        %v1523 = vshrl.u32 %v1522, 7
        %v1524 = vsub.s32 0, %v1523
        %v1525 = vrot.slane %v1520, %v1524
        %v1528 = vsel %vm812, %v1513, 0
        %1530 = vmatprep.subr.mxu0 0.0
        %1531 = vmatpush1.msra.mxu0 %v1515
        %1532 = vmatprep.subr.mxu0 0.0
        %1533 = vmatpush1.msra.mxu0 %v1516
        %1534 = vmatprep.subr.mxu0 0.0
        %1535 = vmatpush1.msra.mxu0 %v1517
        %1536 = vmatprep.subr.mxu0 0.0
        %1537 = vmatpush1.msra.mxu0 %v1518
        %1538 = vmatprep.subr.mxu0 0.0
        %1539 = vmatpush1.msra.mxu0 0.0
        %1540 = vmatprep.subr.mxu0 0.0
        %1541 = vmatpush1.msra.mxu0 0.0
        %1542 = vmatprep.subr.mxu0 0.0
        %1543 = vmatpush1.msra.mxu0 0.0
        %1544 = vmatprep.subr.mxu0 0.0
        %1545 = vmatpush1.msra.mxu0 0.0
        %1546 = vmatprep.subr.mxu0 0.0
        %1547 = vmatpush1.msra.mxu0 0.0
        %1548 = vmatprep.subr.mxu0 0.0
        %1549 = vmatpush1.msra.mxu0 0.0
        %1550 = vmatprep.subr.mxu0 0.0
        %1551 = vmatpush1.msra.mxu0 0.0
        %1552 = vmatprep.subr.mxu0 0.0
        %1553 = vmatpush1.msra.mxu0 0.0
        %1554 = vmatprep.subr.mxu0 0.0
        %1555 = vmatpush1.msra.mxu0 0.0
        %1556 = vmatprep.subr.mxu0 0.0
        %1557 = vmatpush1.msra.mxu0 0.0
        %1558 = vmatprep.subr.mxu0 0.0
        %1559 = vmatpush1.msra.mxu0 0.0
        %1560 = vmatprep.subr.mxu0 0.0
        %1561 = vmatpush1.msra.mxu0 0.0
        %1562 = vmatprep.subr.mxu0 0.0
        %1563 = vmatpush1.msra.mxu0 0.0
        %1564 = vmatprep.subr.mxu0 0.0
        %1565 = vmatpush1.msra.mxu0 0.0
        %1566 = vmatprep.subr.mxu0 0.0
        %1567 = vmatpush1.msra.mxu0 0.0
        %1568 = vmatprep.subr.mxu0 0.0
        %1569 = vmatpush1.msra.mxu0 0.0
        %1570 = vmatprep.subr.mxu0 0.0
        %1571 = vmatpush1.msra.mxu0 0.0
        %1572 = vmatprep.subr.mxu0 0.0
        %1573 = vmatpush1.msra.mxu0 0.0
        %1574 = vmatprep.subr.mxu0 0.0
        %1575 = vmatpush1.msra.mxu0 0.0
        %1576 = vmatprep.subr.mxu0 0.0
        %1577 = vmatpush1.msra.mxu0 0.0
        %1578 = vmatprep.subr.mxu0 0.0
        %1579 = vmatpush1.msra.mxu0 0.0
        %1580 = vmatprep.subr.mxu0 0.0
        %1581 = vmatpush1.msra.mxu0 0.0
        %1582 = vmatprep.subr.mxu0 0.0
        %1583 = vmatpush1.msra.mxu0 0.0
        %1584 = vmatprep.subr.mxu0 0.0
        %1585 = vmatpush1.msra.mxu0 0.0
        %1586 = vmatprep.subr.mxu0 0.0
        %1587 = vmatpush1.msra.mxu0 0.0
        %1588 = vmatprep.subr.mxu0 0.0
        %1589 = vmatpush1.msra.mxu0 0.0
        %1590 = vmatprep.subr.mxu0 0.0
        %1591 = vmatpush1.msra.mxu0 0.0
        %1592 = vmatprep.subr.mxu0 0.0
        %1593 = vmatpush1.msra.mxu0 0.0
        %1594 = vmatprep.mubr.f32.mxu0 0.0
        %1595 = vmatmul.mubr.f32.gmra.mrb[0].mxu0 %v1528
        %v1596 = vpop.f32.mrb[0].mxu0
        %v1597 = vadd.f32 %v1525, %v1596
        %v1598 = vpop.f32.mrb[0].mxu0
        %1599 = vdwg.mxu0
        %v1600 = vmax.f32 %v1597, 0.0
        %s1601 = scalar_lea.vmem [#allocation9], 288
        %v1602 = vld [vmem:[%s1601] sm:$0xff]
        %v1603 = vld [vmem:[%s1601 + $0x8] sm:$0xff]
        %v1604 = vld [vmem:[%s1601 + $0x10] sm:$0xff]
        %v1605 = vld [vmem:[%s1601 + $0x18] sm:$0xff]
        %s1606 = scalar_lea.vmem %s6, 9
        %v1607 = vld [vmem:[%s1606] sm:$0x1]
        %v1609 = vlaneseq
        %v1610 = vshrl.u32 %v1609, 7
        %v1611 = vsub.s32 0, %v1610
        %v1612 = vrot.slane %v1607, %v1611
        %v1615 = vsel %vm812, %v1600, 0
        %1617 = vmatprep.subr.mxu0 0.0
        %1618 = vmatpush1.msra.mxu0 %v1602
        %1619 = vmatprep.subr.mxu0 0.0
        %1620 = vmatpush1.msra.mxu0 %v1603
        %1621 = vmatprep.subr.mxu0 0.0
        %1622 = vmatpush1.msra.mxu0 %v1604
        %1623 = vmatprep.subr.mxu0 0.0
        %1624 = vmatpush1.msra.mxu0 %v1605
        %1625 = vmatprep.subr.mxu0 0.0
        %1626 = vmatpush1.msra.mxu0 0.0
        %1627 = vmatprep.subr.mxu0 0.0
        %1628 = vmatpush1.msra.mxu0 0.0
        %1629 = vmatprep.subr.mxu0 0.0
        %1630 = vmatpush1.msra.mxu0 0.0
        %1631 = vmatprep.subr.mxu0 0.0
        %1632 = vmatpush1.msra.mxu0 0.0
        %1633 = vmatprep.subr.mxu0 0.0
        %1634 = vmatpush1.msra.mxu0 0.0
        %1635 = vmatprep.subr.mxu0 0.0
        %1636 = vmatpush1.msra.mxu0 0.0
        %1637 = vmatprep.subr.mxu0 0.0
        %1638 = vmatpush1.msra.mxu0 0.0
        %1639 = vmatprep.subr.mxu0 0.0
        %1640 = vmatpush1.msra.mxu0 0.0
        %1641 = vmatprep.subr.mxu0 0.0
        %1642 = vmatpush1.msra.mxu0 0.0
        %1643 = vmatprep.subr.mxu0 0.0
        %1644 = vmatpush1.msra.mxu0 0.0
        %1645 = vmatprep.subr.mxu0 0.0
        %1646 = vmatpush1.msra.mxu0 0.0
        %1647 = vmatprep.subr.mxu0 0.0
        %1648 = vmatpush1.msra.mxu0 0.0
        %1649 = vmatprep.subr.mxu0 0.0
        %1650 = vmatpush1.msra.mxu0 0.0
        %1651 = vmatprep.subr.mxu0 0.0
        %1652 = vmatpush1.msra.mxu0 0.0
        %1653 = vmatprep.subr.mxu0 0.0
        %1654 = vmatpush1.msra.mxu0 0.0
        %1655 = vmatprep.subr.mxu0 0.0
        %1656 = vmatpush1.msra.mxu0 0.0
        %1657 = vmatprep.subr.mxu0 0.0
        %1658 = vmatpush1.msra.mxu0 0.0
        %1659 = vmatprep.subr.mxu0 0.0
        %1660 = vmatpush1.msra.mxu0 0.0
        %1661 = vmatprep.subr.mxu0 0.0
        %1662 = vmatpush1.msra.mxu0 0.0
        %1663 = vmatprep.subr.mxu0 0.0
        %1664 = vmatpush1.msra.mxu0 0.0
        %1665 = vmatprep.subr.mxu0 0.0
        %1666 = vmatpush1.msra.mxu0 0.0
        %1667 = vmatprep.subr.mxu0 0.0
        %1668 = vmatpush1.msra.mxu0 0.0
        %1669 = vmatprep.subr.mxu0 0.0
        %1670 = vmatpush1.msra.mxu0 0.0
        %1671 = vmatprep.subr.mxu0 0.0
        %1672 = vmatpush1.msra.mxu0 0.0
        %1673 = vmatprep.subr.mxu0 0.0
        %1674 = vmatpush1.msra.mxu0 0.0
        %1675 = vmatprep.subr.mxu0 0.0
        %1676 = vmatpush1.msra.mxu0 0.0
        %1677 = vmatprep.subr.mxu0 0.0
        %1678 = vmatpush1.msra.mxu0 0.0
        %1679 = vmatprep.subr.mxu0 0.0
        %1680 = vmatpush1.msra.mxu0 0.0
        %1681 = vmatprep.mubr.f32.mxu0 0.0
        %1682 = vmatmul.mubr.f32.gmra.mrb[0].mxu0 %v1615
        %v1683 = vpop.f32.mrb[0].mxu0
        %v1684 = vadd.f32 %v1612, %v1683
        %v1685 = vpop.f32.mrb[0].mxu0
        %1686 = vdwg.mxu0
        %v1687 = vadd.f32 %v1512, %v1684
        %v1688 = vld [vmem:[%s7] sm:$0x1]
        %v1689 = vmax.f32 %v1687, 0.0
        %v1690 = vld [vmem:[#allocation2] sm:$0x1]
        %1692 = vset.pattern.permute.xlu0 0
        %1693 = vperm.xlu0 %1692, %v1690
        %v1694 = vpop.permute.xlu0 %1693
        %v1696 = vlaneseq
        %v1697 = vshrl.u32 %v1696, 7
        %v1698 = vsub.s32 0, %v1697
        %v1699 = vrot.slane %v1694, %v1698
        %v1701 = vsel %vm812, %v1688, 0
        %v1704 = vsel %vm812, %v1689, 0
        %1706 = vmatprep.subr.mxu0 0.0
        %1707 = vmatpush1.xpose.msra.mxu0 %v1704
        %1708 = vmatprep.subr.mxu0 0.0
        %1709 = vmatpush1.xpose.msra.mxu0 0.0
        %1710 = vmatprep.subr.mxu0 0.0
        %1711 = vmatpush1.xpose.msra.mxu0 0.0
        %1712 = vmatprep.subr.mxu0 0.0
        %1713 = vmatpush1.xpose.msra.mxu0 0.0
        %1714 = vmatprep.subr.mxu0 0.0
        %1715 = vmatpush1.xpose.msra.mxu0 0.0
        %1716 = vmatprep.subr.mxu0 0.0
        %1717 = vmatpush1.xpose.msra.mxu0 0.0
        %1718 = vmatprep.subr.mxu0 0.0
        %1719 = vmatpush1.xpose.msra.mxu0 0.0
        %1720 = vmatprep.subr.mxu0 0.0
        %1721 = vmatpush1.xpose.msra.mxu0 0.0
        %1722 = vmatprep.subr.mxu0 0.0
        %1723 = vmatpush1.xpose.msra.mxu0 0.0
        %1724 = vmatprep.subr.mxu0 0.0
        %1725 = vmatpush1.xpose.msra.mxu0 0.0
        %1726 = vmatprep.subr.mxu0 0.0
        %1727 = vmatpush1.xpose.msra.mxu0 0.0
        %1728 = vmatprep.subr.mxu0 0.0
        %1729 = vmatpush1.xpose.msra.mxu0 0.0
        %1730 = vmatprep.subr.mxu0 0.0
        %1731 = vmatpush1.xpose.msra.mxu0 0.0
        %1732 = vmatprep.subr.mxu0 0.0
        %1733 = vmatpush1.xpose.msra.mxu0 0.0
        %1734 = vmatprep.subr.mxu0 0.0
        %1735 = vmatpush1.xpose.msra.mxu0 0.0
        %1736 = vmatprep.subr.mxu0 0.0
        %1737 = vmatpush1.xpose.msra.mxu0 0.0
        %1738 = vmatprep.subr.mxu0 0.0
        %1739 = vmatpush1.xpose.msra.mxu0 0.0
        %1740 = vmatprep.subr.mxu0 0.0
        %1741 = vmatpush1.xpose.msra.mxu0 0.0
        %1742 = vmatprep.subr.mxu0 0.0
        %1743 = vmatpush1.xpose.msra.mxu0 0.0
        %1744 = vmatprep.subr.mxu0 0.0
        %1745 = vmatpush1.xpose.msra.mxu0 0.0
        %1746 = vmatprep.subr.mxu0 0.0
        %1747 = vmatpush1.xpose.msra.mxu0 0.0
        %1748 = vmatprep.subr.mxu0 0.0
        %1749 = vmatpush1.xpose.msra.mxu0 0.0
        %1750 = vmatprep.subr.mxu0 0.0
        %1751 = vmatpush1.xpose.msra.mxu0 0.0
        %1752 = vmatprep.subr.mxu0 0.0
        %1753 = vmatpush1.xpose.msra.mxu0 0.0
        %1754 = vmatprep.subr.mxu0 0.0
        %1755 = vmatpush1.xpose.msra.mxu0 0.0
        %1756 = vmatprep.subr.mxu0 0.0
        %1757 = vmatpush1.xpose.msra.mxu0 0.0
        %1758 = vmatprep.subr.mxu0 0.0
        %1759 = vmatpush1.xpose.msra.mxu0 0.0
        %1760 = vmatprep.subr.mxu0 0.0
        %1761 = vmatpush1.xpose.msra.mxu0 0.0
        %1762 = vmatprep.subr.mxu0 0.0
        %1763 = vmatpush1.xpose.msra.mxu0 0.0
        %1764 = vmatprep.subr.mxu0 0.0
        %1765 = vmatpush1.xpose.msra.mxu0 0.0
        %1766 = vmatprep.subr.mxu0 0.0
        %1767 = vmatpush1.xpose.msra.mxu0 0.0
        %1768 = vmatprep.subr.mxu0 0.0
        %1769 = vmatpush1.xpose.msra.mxu0 0.0
        %1770 = vmatprep.mubr.f32.mxu0 0.0
        %1771 = vmatmul.mubr.f32.gmra.mrb[0].mxu0 %v1701
        %v1772 = vpop.f32.mrb[0].mxu0
        %v1773 = vadd.f32 %v1699, %v1772
        %v1774 = vpop.f32.mrb[0].mxu0
        %1775 = vdwg.mxu0
        %vm1776 = vcmask 57344
        %1777 = vst.msk [vmem:[%s440] sm:$0x1] %vm1776, %v1773
        %s1778 = sand.u32 %s258, 1
        %s1779 = scalar_lea.sflag [#allocation5], %s1778
        %s1780 = sand.u32 %s258, 1
        %s1781 = scalar_lea.vmem [#allocation11], %s1780
        // Predicated region
        $region73: #{tpu_custom_call.1} parent=55 // pred_check
          %p1782 = pneg %p268
        $region74: #{tpu_custom_call.1} parent=55 // pred_check_branch
          %1784 = sbr.rel (%p1782) target = $region76
        $region75: #{tpu_custom_call.1} parent=55 // pred_region
          %s1786 = ssub.s32 16, 16
          %1787 = vsyncadd %s1779, %s1786
          %s1788 = sadd.s32 %s35, %s34
          %s1789 = smul.addr %s1788, 16
          %s1790 = scalar_lea.hbm %s9, %s1789
          %s1792 = sshll.u32 %s1781, 4
          %s1793 = int_to_ptr.vmem [resolvable:$true] %s1792
          %1795 = dma.vmem_to_hbm [thread:$0]  %s1793, 16, %s1790, %s1779
        $region76: #{tpu_custom_call.1} parent=55 // pred_fallthru
          _
      $region56: #{tpu_custom_call.1} parent=5 // pred_fallthru
        _
      %p1796 = scmp.le.s32.totalorder 2, %s25
      // Predicated region
      $region77: #{tpu_custom_call.1} parent=5 // pred_check
        %p1797 = pneg %p1796
      $region78: #{tpu_custom_call.1} parent=5 // pred_check_branch
        %1799 = sbr.rel (%p1797) target = $region80
      $region79: #{tpu_custom_call.1} parent=5 // pred_region
        %s1800 = ssub.s32 %s25, 2
        // Predicated region
        $region81: #{tpu_custom_call.1} parent=79 // pred_check
          %p1801 = pneg %p274
        $region82: #{tpu_custom_call.1} parent=79 // pred_check_branch
          %1803 = sbr.rel (%p1801) target = $region84
        $region83: #{tpu_custom_call.1} parent=79 // pred_region
          %s1804 = sand.u32 %s259, 1
          %s1805 = scalar_lea.sflag [#allocation5], %s1804
          %s1806 = sand.u32 %s259, 1
          %s1807 = scalar_lea.vmem [#allocation11], %s1806
          %1808 = dma.done %s1805, 16
        $region84: #{tpu_custom_call.1} parent=79 // pred_fallthru
          _
      $region80: #{tpu_custom_call.1} parent=5 // pred_fallthru
        _
    $region6: #{tpu_custom_call.1} parent=1 // loop_footer
      %s29 = sadd.s32 1, %s25
    $region7: #{tpu_custom_call.1} parent=1 // loop_footer_branch
      %24 = sbr.rel target = $region3
    $region8: #{tpu_custom_call.1} parent=1 // loop_exit
      _
    %1809 = vsyncpa [#allocation4], 1
    %s1810 = scalar_lea.sflag [#allocation4], 1
    %1811 = vsyncpa %s1810, 1
    %1812 = vsyncpa [#allocation7], 1
    %1813 = vsyncpa [#allocation10], 1
    %1814 = vsyncpa [#allocation5], 1
    %s1815 = scalar_lea.sflag [#allocation5], 1
    %1816 = vsyncpa %s1815, 1

</llo_original>
